<compile_context>
chip_gen: v7x
topology: tpu7x:2x2x1
jax: 0.10.0
libtpu: 0.0.40
codegen_flags: <defaults>
</compile_context>

<pallas_src>
import functools
import math

import jax
import jax.numpy as jnp
import numpy as np
from jax.experimental import pallas as pl
from jax.experimental.pallas import tpu as pltpu


def _fsp_kernel(guide_ref, main_ref, w1g_ref, w1m_ref, b1_ref, w2_ref, b2_ref,
                out_ref, *, bt, hw):
    C, L = guide_ref.shape            # L == bt * hw (lane-dense when packed)
    g = guide_ref[...]                # (C, L)
    m = main_ref[...]                 # (C, L)

    # Per-batch, per-channel global average pool — no (2C, HW) concat copy.
    g3 = g.reshape(C, bt, hw)
    m3 = m.reshape(C, bt, hw)
    inv_hw = 1.0 / float(hw)
    pg = jnp.sum(g3, axis=-1) * inv_hw        # (C, bt)  pooled guide channels
    pm = jnp.sum(m3, axis=-1) * inv_hw        # (C, bt)  pooled main channels

    # fc: Linear(2C -> hid) -> ReLU -> Linear(hid -> C) -> Sigmoid, batched
    # over the bt pooled columns.  W1 is pre-split into [guide | main] halves.
    h = (jnp.dot(w1g_ref[...], pg, preferred_element_type=jnp.float32)
         + jnp.dot(w1m_ref[...], pm, preferred_element_type=jnp.float32)
         + b1_ref[...])                       # (hid, bt)
    h = jnp.maximum(h, 0.0)
    z = jax.nn.sigmoid(
        jnp.dot(w2_ref[...], h, preferred_element_type=jnp.float32)
        + b2_ref[...])                        # (C, bt)

    # out = main + channel_weight * guide (broadcast over spatial), written
    # back as one lane-dense (C, bt*hw) slab.
    out_ref[...] = (m3 + z[:, :, None] * g3).reshape(C, L)


def _pick_bt(B, C, HW, target_tile_bytes=512 * 1024):
    """Number of batch elements packed along the lane axis per grid step."""
    base = 128 // math.gcd(HW, 128)      # min pack for a 128-multiple lane dim
    if base > B or B % base != 0:
        return 1                         # fallback: still correct, masked stores
    bt = base
    # Grow the tile toward ~512 KiB per input while keeping >=2 grid steps
    # (so v7x's two TensorCores can both run).
    while (B % (2 * bt) == 0 and B // (2 * bt) >= 2
           and 2 * bt * C * HW * 4 <= target_tile_bytes):
        bt *= 2
    return bt


def fsp_forward(guide, main, w1, b1, w2, b2):
    """guide/main: (B, C, H, W) f32.  w1: (hid, 2C), b1: (hid, 1),
    w2: (C, hid), b2: (C, 1).  Returns (B, C, H, W)."""
    B, C, H, W = guide.shape
    HW = H * W
    hid = w1.shape[0]

    bt = _pick_bt(B, C, HW)
    nsteps = B // bt
    L = bt * HW

    def pack(x):  # (B, C, H, W) -> (B//bt, C, bt*HW): batch packed along lanes
        x = x.reshape(nsteps, bt, C, HW)
        return jnp.transpose(x, (0, 2, 1, 3)).reshape(nsteps, C, L)

    g3 = pack(guide)
    m3 = pack(main)

    # Split W1 into its guide / main column halves (removes in-kernel concat).
    w1g = w1[:, :C]
    w1m = w1[:, C:]

    # Explicit VMEM budget (double-buffered guide/main/out tiles + weights),
    # with headroom but capped well under v7x's 64 MiB.
    tile_bytes = C * L * 4
    est_vmem = 3 * 2 * tile_bytes + 4 * (2 * hid * C + hid + C * hid + C)
    vmem_limit = int(min(48 * 1024 * 1024, max(8 * 1024 * 1024, 4 * est_vmem)))

    out3 = pl.pallas_call(
        functools.partial(_fsp_kernel, bt=bt, hw=HW),
        out_shape=jax.ShapeDtypeStruct((nsteps, C, L), jnp.float32),
        grid_spec=pltpu.PrefetchScalarGridSpec(
            num_scalar_prefetch=0,
            grid=(nsteps,),
            in_specs=[
                pl.BlockSpec((None, C, L), lambda b: (b, 0, 0)),   # guide slab
                pl.BlockSpec((None, C, L), lambda b: (b, 0, 0)),   # main slab
                pl.BlockSpec((hid, C), lambda b: (0, 0)),          # W1 guide half
                pl.BlockSpec((hid, C), lambda b: (0, 0)),          # W1 main half
                pl.BlockSpec((hid, 1), lambda b: (0, 0)),          # b1
                pl.BlockSpec((C, hid), lambda b: (0, 0)),          # W2
                pl.BlockSpec((C, 1), lambda b: (0, 0)),            # b2
            ],
            out_specs=pl.BlockSpec((None, C, L), lambda b: (b, 0, 0)),
        ),
        compiler_params=pltpu.CompilerParams(
            dimension_semantics=("parallel",),
            vmem_limit_bytes=vmem_limit),
    )(g3, m3, w1g, w1m, b1, w2, b2)

    # Unpack lanes back to (B, C, H, W).
    out = out3.reshape(nsteps, C, bt, HW)
    out = jnp.transpose(out, (0, 2, 1, 3)).reshape(B, C, H, W)
    return out


def _reference(guide, main, w1, b1, w2, b2):
    cat = jnp.concatenate([guide, main], axis=1)          # (B, 2C, H, W)
    y = jnp.mean(cat, axis=(2, 3))                        # (B, 2C)
    h = jnp.maximum(y @ w1.T + b1[:, 0], 0.0)             # (B, hid)
    z = jax.nn.sigmoid(h @ w2.T + b2[:, 0])               # (B, C)
    return main + z[:, :, None, None] * guide


if __name__ == "__main__":
    # in_planes = 32 per path, out_planes = 32, reduction = 16
    #   -> fc: Linear(64 -> 2) -> ReLU -> Linear(2 -> 32) -> Sigmoid.
    B, C, H, W = 8, 32, 8, 8
    reduction = 16
    hid = C // reduction  # 2

    key = jax.random.PRNGKey(0)
    kg, km, k1, k2, k3, k4 = jax.random.split(key, 6)

    guide = jax.random.normal(kg, (B, C, H, W), dtype=jnp.float32)
    main = jax.random.normal(km, (B, C, H, W), dtype=jnp.float32)

    w1 = 0.1 * jax.random.normal(k1, (hid, 2 * C), dtype=jnp.float32)  # Linear(2C, hid)
    b1 = 0.1 * jax.random.normal(k2, (hid, 1), dtype=jnp.float32)
    w2 = 0.1 * jax.random.normal(k3, (C, hid), dtype=jnp.float32)      # Linear(hid, C)
    b2 = 0.1 * jax.random.normal(k4, (C, 1), dtype=jnp.float32)

    out = fsp_forward(guide, main, w1, b1, w2, b2)
    out = jax.block_until_ready(out)

    ref = _reference(guide, main, w1, b1, w2, b2)
    np.testing.assert_allclose(np.asarray(out), np.asarray(ref),
                               rtol=1e-5, atol=1e-5)
    print("KERNEL_OK")
</pallas_src>

<mosaic_0001>
module attributes {stable_mosaic.version = 11 : i64} {
  func.func @_fsp_kernel(%arg0: i32, %arg1: memref<1x32x256xf32, #tpu.memory_space<vmem>>, %arg2: memref<1x32x256xf32, #tpu.memory_space<vmem>>, %arg3: memref<2x32xf32, #tpu.memory_space<vmem>>, %arg4: memref<2x32xf32, #tpu.memory_space<vmem>>, %arg5: memref<2x1xf32, #tpu.memory_space<vmem>>, %arg6: memref<32x2xf32, #tpu.memory_space<vmem>>, %arg7: memref<32x1xf32, #tpu.memory_space<vmem>>, %arg8: memref<1x32x256xf32, #tpu.memory_space<vmem>>) attributes {dimension_semantics = [#tpu.dimension_semantics<parallel>], iteration_bounds = array<i64: 2>, scalar_prefetch = 0 : i64, scratch_operands = 0 : i64, tpu.core_type = #tpu.core_type<tc>, window_params = [{transform_indices = @transform_0, window_bounds = array<i64: 1, 32, 256>}, {transform_indices = @transform_1, window_bounds = array<i64: 1, 32, 256>}, {pipeline_mode = #tpu.pipeline_mode<synchronous>, transform_indices = @transform_2, window_bounds = array<i64: 2, 32>}, {pipeline_mode = #tpu.pipeline_mode<synchronous>, transform_indices = @transform_3, window_bounds = array<i64: 2, 32>}, {pipeline_mode = #tpu.pipeline_mode<synchronous>, transform_indices = @transform_4, window_bounds = array<i64: 2, 1>}, {pipeline_mode = #tpu.pipeline_mode<synchronous>, transform_indices = @transform_5, window_bounds = array<i64: 32, 2>}, {pipeline_mode = #tpu.pipeline_mode<synchronous>, transform_indices = @transform_6, window_bounds = array<i64: 32, 1>}, {transform_indices = @transform_7, window_bounds = array<i64: 1, 32, 256>}]} {
    %c0 = arith.constant 0 : index
    %c0_0 = arith.constant 0 : index
    %c0_1 = arith.constant 0 : index
    %0 = vector.load %arg1[%c0, %c0_0, %c0_1] : memref<1x32x256xf32, #tpu.memory_space<vmem>>, vector<1x32x256xf32>
    %1 = vector.shape_cast %0 : vector<1x32x256xf32> to vector<32x256xf32>
    %c0_2 = arith.constant 0 : index
    %c0_3 = arith.constant 0 : index
    %c0_4 = arith.constant 0 : index
    %2 = vector.load %arg2[%c0_2, %c0_3, %c0_4] : memref<1x32x256xf32, #tpu.memory_space<vmem>>, vector<1x32x256xf32>
    %3 = vector.shape_cast %2 : vector<1x32x256xf32> to vector<32x256xf32>
    %4 = vector.shape_cast %1 : vector<32x256xf32> to vector<32x4x64xf32>
    %5 = vector.shape_cast %3 : vector<32x256xf32> to vector<32x4x64xf32>
    %cst = arith.constant dense<0.000000e+00> : vector<32x4xf32>
    %6 = vector.multi_reduction <add>, %4, %cst [2] : vector<32x4x64xf32> to vector<32x4xf32>
    %cst_5 = arith.constant 1.562500e-02 : f32
    %7 = vector.broadcast %cst_5 : f32 to vector<32x4xf32>
    %8 = arith.mulf %6, %7 : vector<32x4xf32>
    %cst_6 = arith.constant dense<0.000000e+00> : vector<32x4xf32>
    %9 = vector.multi_reduction <add>, %5, %cst_6 [2] : vector<32x4x64xf32> to vector<32x4xf32>
    %cst_7 = arith.constant 1.562500e-02 : f32
    %10 = vector.broadcast %cst_7 : f32 to vector<32x4xf32>
    %11 = arith.mulf %9, %10 : vector<32x4xf32>
    %c0_8 = arith.constant 0 : index
    %c0_9 = arith.constant 0 : index
    %12 = vector.load %arg3[%c0_8, %c0_9] : memref<2x32xf32, #tpu.memory_space<vmem>>, vector<2x32xf32>
    %cst_10 = arith.constant dense<0.000000e+00> : vector<2x4xf32>
    %13 = tpu.matmul %12, %8, %cst_10 {dimension_numbers = #tpu.dot_dimension_numbers<[1], [0], [0], [1], [0, 0, 1, 1], [], []>} : vector<2x32xf32>, vector<32x4xf32>, vector<2x4xf32> -> vector<2x4xf32>
    %c0_11 = arith.constant 0 : index
    %c0_12 = arith.constant 0 : index
    %14 = vector.load %arg4[%c0_11, %c0_12] : memref<2x32xf32, #tpu.memory_space<vmem>>, vector<2x32xf32>
    %cst_13 = arith.constant dense<0.000000e+00> : vector<2x4xf32>
    %15 = tpu.matmul %14, %11, %cst_13 {dimension_numbers = #tpu.dot_dimension_numbers<[1], [0], [0], [1], [0, 0, 1, 1], [], []>} : vector<2x32xf32>, vector<32x4xf32>, vector<2x4xf32> -> vector<2x4xf32>
    %16 = arith.addf %13, %15 : vector<2x4xf32>
    %c0_14 = arith.constant 0 : index
    %c0_15 = arith.constant 0 : index
    %17 = vector.load %arg5[%c0_14, %c0_15] : memref<2x1xf32, #tpu.memory_space<vmem>>, vector<2x1xf32>
    %18 = vector.broadcast %17 : vector<2x1xf32> to vector<2x4xf32>
    %19 = arith.addf %16, %18 : vector<2x4xf32>
    %cst_16 = arith.constant 0.000000e+00 : f32
    %20 = vector.broadcast %cst_16 : f32 to vector<2x4xf32>
    %21 = arith.maximumf %19, %20 : vector<2x4xf32>
    %c0_17 = arith.constant 0 : index
    %c0_18 = arith.constant 0 : index
    %22 = vector.load %arg6[%c0_17, %c0_18] : memref<32x2xf32, #tpu.memory_space<vmem>>, vector<32x2xf32>
    %cst_19 = arith.constant dense<0.000000e+00> : vector<32x4xf32>
    %23 = tpu.matmul %22, %21, %cst_19 {dimension_numbers = #tpu.dot_dimension_numbers<[1], [0], [0], [1], [0, 0, 1, 1], [], []>} : vector<32x2xf32>, vector<2x4xf32>, vector<32x4xf32> -> vector<32x4xf32>
    %c0_20 = arith.constant 0 : index
    %c0_21 = arith.constant 0 : index
    %24 = vector.load %arg7[%c0_20, %c0_21] : memref<32x1xf32, #tpu.memory_space<vmem>>, vector<32x1xf32>
    %25 = vector.broadcast %24 : vector<32x1xf32> to vector<32x4xf32>
    %26 = arith.addf %23, %25 : vector<32x4xf32>
    %27 = arith.negf %26 : vector<32x4xf32>
    %28 = math.exp %27 : vector<32x4xf32>
    %cst_22 = arith.constant 1.000000e+00 : f32
    %29 = vector.broadcast %cst_22 : f32 to vector<32x4xf32>
    %30 = arith.addf %29, %28 : vector<32x4xf32>
    %31 = arith.divf %29, %30 : vector<32x4xf32>
    %32 = vector.shape_cast %31 : vector<32x4xf32> to vector<32x4x1xf32>
    %33 = vector.broadcast %32 : vector<32x4x1xf32> to vector<32x4x64xf32>
    %34 = arith.mulf %33, %4 : vector<32x4x64xf32>
    %35 = arith.addf %5, %34 : vector<32x4x64xf32>
    %36 = vector.shape_cast %35 : vector<32x4x64xf32> to vector<32x256xf32>
    %c0_23 = arith.constant 0 : index
    %c0_24 = arith.constant 0 : index
    %c0_25 = arith.constant 0 : index
    %37 = vector.load %arg8[%c0_23, %c0_24, %c0_25] : memref<1x32x256xf32, #tpu.memory_space<vmem>>, vector<1x32x256xf32>
    %38 = vector.shape_cast %37 : vector<1x32x256xf32> to vector<32x256xf32>
    %39 = vector.shape_cast %36 : vector<32x256xf32> to vector<1x32x256xf32>
    tpu.vector_store %arg8[%c0_23, %c0_24, %c0_25], %39 {strides = array<i32>} : memref<1x32x256xf32, #tpu.memory_space<vmem>>, vector<1x32x256xf32>,
    return
  }
  func.func @transform_0(%arg0: i32) -> (i32, i32, i32) {
    %c0_i32 = arith.constant 0 : i32
    %c0_i32_0 = arith.constant 0 : i32
    %c0_i32_1 = arith.constant 0 : i32
    return %arg0, %c0_i32, %c0_i32_0 : i32, i32, i32
  }
  func.func @transform_1(%arg0: i32) -> (i32, i32, i32) {
    %c0_i32 = arith.constant 0 : i32
    %c0_i32_0 = arith.constant 0 : i32
    %c0_i32_1 = arith.constant 0 : i32
    return %arg0, %c0_i32, %c0_i32_0 : i32, i32, i32
  }
  func.func @transform_2(%arg0: i32) -> (i32, i32) {
    %c0_i32 = arith.constant 0 : i32
    %c0_i32_0 = arith.constant 0 : i32
    %c0_i32_1 = arith.constant 0 : i32
    return %c0_i32, %c0_i32_0 : i32, i32
  }
  func.func @transform_3(%arg0: i32) -> (i32, i32) {
    %c0_i32 = arith.constant 0 : i32
    %c0_i32_0 = arith.constant 0 : i32
    %c0_i32_1 = arith.constant 0 : i32
    return %c0_i32, %c0_i32_0 : i32, i32
  }
  func.func @transform_4(%arg0: i32) -> (i32, i32) {
    %c0_i32 = arith.constant 0 : i32
    %c0_i32_0 = arith.constant 0 : i32
    %c0_i32_1 = arith.constant 0 : i32
    return %c0_i32, %c0_i32_0 : i32, i32
  }
  func.func @transform_5(%arg0: i32) -> (i32, i32) {
    %c0_i32 = arith.constant 0 : i32
    %c0_i32_0 = arith.constant 0 : i32
    %c0_i32_1 = arith.constant 0 : i32
    return %c0_i32, %c0_i32_0 : i32, i32
  }
  func.func @transform_6(%arg0: i32) -> (i32, i32) {
    %c0_i32 = arith.constant 0 : i32
    %c0_i32_0 = arith.constant 0 : i32
    %c0_i32_1 = arith.constant 0 : i32
    return %c0_i32, %c0_i32_0 : i32, i32
  }
  func.func @transform_7(%arg0: i32) -> (i32, i32, i32) {
    %c0_i32 = arith.constant 0 : i32
    %c0_i32_0 = arith.constant 0 : i32
    %c0_i32_1 = arith.constant 0 : i32
    return %arg0, %c0_i32, %c0_i32_0 : i32, i32, i32
  }
}

</mosaic_0001>

<llo_original>
// kernel: tpu_custom_call.1
$region0: #{tpu_custom_call.1}
  #allocation0 [shape = 'u32[]', space=smem, size = 0x4, offset = 0x4, fixed_abs, tag = 'smem constant byte address 0x4 - core index']
  #allocation1 [shape = 'u32[144,128]{1,0:T(1,128)}', space=vmem, size = 0x12000, scoped, tag = 'internal scratch']
  %s0 = inlined_call_operand.hbm [shape: f32[2,32,256], index: 0, kind: input, shape index: {}]
  %s1 = inlined_call_operand.hbm [shape: f32[2,32,256], index: 1, kind: input, shape index: {}]
  %s2 = inlined_call_operand.vmem [shape: f32[2,32], index: 2, kind: input, shape index: {}]
  %s3 = inlined_call_operand.vmem [shape: f32[2,32], index: 3, kind: input, shape index: {}]
  %s4 = inlined_call_operand.vmem [shape: f32[2,1], index: 4, kind: input, shape index: {}]
  %s5 = inlined_call_operand.vmem [shape: f32[32,2], index: 5, kind: input, shape index: {}]
  %s6 = inlined_call_operand.vmem [shape: f32[32,1], index: 6, kind: input, shape index: {}]
  %s7 = inlined_call_operand.hbm [shape: f32[2,32,256], index: 7, kind: output, shape index: {}]
  %s8 = sld [smem:[#allocation0]]
  $region69: #{tpu_custom_call.1} parent=0
    _
  %s10 = ssub.s32 1, %s8
  %s11 = scalar_select 0, %s10, %s8
  $region1: #{tpu_custom_call.1} parent=0
    #allocation2 [shape = 'u8[65536]{0}', space=vmem, size = 0x10000, scoped, tag = 'input window, operand 0']
    #allocation3 [shape = 's32[2]{0}', space=sflag, size = 0x8, scoped, tag = 'scoped memory for tpu_custom_call.1']
    #allocation4 [shape = 's32[2]{0}', space=sflag, size = 0x8, scoped, tag = 'scoped memory for tpu_custom_call.1']
    #allocation5 [shape = 'u8[65536]{0}', space=vmem, size = 0x10000, scoped, tag = 'input window, operand 1']
    #allocation6 [shape = 's32[2]{0}', space=sflag, size = 0x8, scoped, tag = 'scoped memory for tpu_custom_call.1']
    #allocation7 [shape = 'u8[65536]{0}', space=vmem, size = 0x10000, scoped, tag = 'output window, operand 0']
    %12 = vsyncpa [#allocation3], 0
    %s13 = scalar_lea.sflag [#allocation3], 1
    %14 = vsyncpa %s13, 0
    %15 = vsyncpa [#allocation6], 0
    %s16 = scalar_lea.sflag [#allocation6], 1
    %17 = vsyncpa %s16, 0
    %18 = vsyncpa [#allocation4], 0
    %s19 = scalar_lea.sflag [#allocation4], 1
    %20 = vsyncpa %s19, 0
    loop: start=0, step=1, limit=4
    $region2: #{tpu_custom_call.1} parent=1 // loop_pre_header
      _
    $region3: #{tpu_custom_call.1} parent=1 // loop_header
      %s22 = sphi 0, %s26
      %p23 = scmp.ge.s32.totalorder %s22, 4
      %s32 = sphi 0, %s34
      %s35 = sphi 0, %s32
      %s36 = sphi 0, %s35
      %s52 = sphi 0, %s36
      %s58 = sphi 0, %s60
      %s61 = sphi 0, %s58
      %s62 = sphi 0, %s61
      %s78 = sphi 0, %s62
      %s82 = sphi 0, %s82
      %s84 = sphi 0, %s82
      %s85 = sphi 0, %s84
      %s99 = sphi 0, %s85
      %s103 = sphi 0, %s103
      %s105 = sphi 0, %s103
      %s106 = sphi 0, %s105
      %s120 = sphi 0, %s106
      %s124 = sphi 0, %s124
      %s126 = sphi 0, %s124
      %s127 = sphi 0, %s126
      %s141 = sphi 0, %s127
      %s145 = sphi 0, %s145
      %s147 = sphi 0, %s145
      %s148 = sphi 0, %s147
      %s162 = sphi 0, %s148
      %s166 = sphi 0, %s166
      %s168 = sphi 0, %s166
      %s169 = sphi 0, %s168
      %s183 = sphi 0, %s169
      %s189 = sphi 0, %s191
      %s192 = sphi 0, %s189
      %s193 = sphi 0, %s192
      %s209 = sphi 0, %s193
    $region4: #{tpu_custom_call.1} parent=1 // loop_header_branch
      %25 = sbr.rel (%p23) target = $region8
    $region5: #{tpu_custom_call.1} parent=1 // loop_body
      %s27 = ssub.s32 %s22, 1
      %s28 = ssub.s32 %s22, 2
      %s29 = sadd.s32 %s22, 1
      %s30 = ssub.s32 %s22, %s29
      %p31 = scmp.eq.s32.totalorder %s30, 0
      %s33 = sadd.s32 %s32, 1
      %s34 = scalar_select %p31, %s32, %s33
      %p37 = pneg %p31
      %p38 = scmp.eq.s32.totalorder %s22, 1
      %p39 = por %p37, %p38
      %p40 = scmp.ne.s32.totalorder %s32, %s35
      %p41 = scmp.eq.s32.totalorder %s22, 0
      %p42 = por %p40, %p41
      %p43 = scmp.ne.s32.totalorder %s32, %s35
      %p44 = scmp.eq.s32.totalorder %s27, 1
      %p45 = por %p43, %p44
      %p46 = scmp.ne.s32.totalorder %s35, %s36
      %p47 = scmp.eq.s32.totalorder %s27, 0
      %p48 = por %p46, %p47
      %p49 = scmp.ne.s32.totalorder %s35, %s36
      %p50 = scmp.eq.s32.totalorder %s28, 1
      %p51 = por %p49, %p50
      %p53 = scmp.ne.s32.totalorder %s36, %s52
      %p54 = scmp.eq.s32.totalorder %s28, 0
      %p55 = por %p53, %p54
      %s56 = ssub.s32 %s22, %s29
      %p57 = scmp.eq.s32.totalorder %s56, 0
      %s59 = sadd.s32 %s58, 1
      %s60 = scalar_select %p57, %s58, %s59
      %p63 = pneg %p57
      %p64 = scmp.eq.s32.totalorder %s22, 1
      %p65 = por %p63, %p64
      %p66 = scmp.ne.s32.totalorder %s58, %s61
      %p67 = scmp.eq.s32.totalorder %s22, 0
      %p68 = por %p66, %p67
      %p69 = scmp.ne.s32.totalorder %s58, %s61
      %p70 = scmp.eq.s32.totalorder %s27, 1
      %p71 = por %p69, %p70
      %p72 = scmp.ne.s32.totalorder %s61, %s62
      %p73 = scmp.eq.s32.totalorder %s27, 0
      %p74 = por %p72, %p73
      %p75 = scmp.ne.s32.totalorder %s61, %s62
      %p76 = scmp.eq.s32.totalorder %s28, 1
      %p77 = por %p75, %p76
      %p79 = scmp.ne.s32.totalorder %s62, %s78
      %p80 = scmp.eq.s32.totalorder %s28, 0
      %p81 = por %p79, %p80
      %s83 = sadd.s32 %s82, 1
      %p86 = scmp.eq.s32.totalorder %s22, 1
      %p87 = scmp.ne.s32.totalorder %s82, %s84
      %p88 = scmp.eq.s32.totalorder %s22, 0
      %p89 = por %p87, %p88
      %p90 = scmp.ne.s32.totalorder %s82, %s84
      %p91 = scmp.eq.s32.totalorder %s27, 1
      %p92 = por %p90, %p91
      %p93 = scmp.ne.s32.totalorder %s84, %s85
      %p94 = scmp.eq.s32.totalorder %s27, 0
      %p95 = por %p93, %p94
      %p96 = scmp.ne.s32.totalorder %s84, %s85
      %p97 = scmp.eq.s32.totalorder %s28, 1
      %p98 = por %p96, %p97
      %p100 = scmp.ne.s32.totalorder %s85, %s99
      %p101 = scmp.eq.s32.totalorder %s28, 0
      %p102 = por %p100, %p101
      %s104 = sadd.s32 %s103, 1
      %p107 = scmp.eq.s32.totalorder %s22, 1
      %p108 = scmp.ne.s32.totalorder %s103, %s105
      %p109 = scmp.eq.s32.totalorder %s22, 0
      %p110 = por %p108, %p109
      %p111 = scmp.ne.s32.totalorder %s103, %s105
      %p112 = scmp.eq.s32.totalorder %s27, 1
      %p113 = por %p111, %p112
      %p114 = scmp.ne.s32.totalorder %s105, %s106
      %p115 = scmp.eq.s32.totalorder %s27, 0
      %p116 = por %p114, %p115
      %p117 = scmp.ne.s32.totalorder %s105, %s106
      %p118 = scmp.eq.s32.totalorder %s28, 1
      %p119 = por %p117, %p118
      %p121 = scmp.ne.s32.totalorder %s106, %s120
      %p122 = scmp.eq.s32.totalorder %s28, 0
      %p123 = por %p121, %p122
      %s125 = sadd.s32 %s124, 1
      %p128 = scmp.eq.s32.totalorder %s22, 1
      %p129 = scmp.ne.s32.totalorder %s124, %s126
      %p130 = scmp.eq.s32.totalorder %s22, 0
      %p131 = por %p129, %p130
      %p132 = scmp.ne.s32.totalorder %s124, %s126
      %p133 = scmp.eq.s32.totalorder %s27, 1
      %p134 = por %p132, %p133
      %p135 = scmp.ne.s32.totalorder %s126, %s127
      %p136 = scmp.eq.s32.totalorder %s27, 0
      %p137 = por %p135, %p136
      %p138 = scmp.ne.s32.totalorder %s126, %s127
      %p139 = scmp.eq.s32.totalorder %s28, 1
      %p140 = por %p138, %p139
      %p142 = scmp.ne.s32.totalorder %s127, %s141
      %p143 = scmp.eq.s32.totalorder %s28, 0
      %p144 = por %p142, %p143
      %s146 = sadd.s32 %s145, 1
      %p149 = scmp.eq.s32.totalorder %s22, 1
      %p150 = scmp.ne.s32.totalorder %s145, %s147
      %p151 = scmp.eq.s32.totalorder %s22, 0
      %p152 = por %p150, %p151
      %p153 = scmp.ne.s32.totalorder %s145, %s147
      %p154 = scmp.eq.s32.totalorder %s27, 1
      %p155 = por %p153, %p154
      %p156 = scmp.ne.s32.totalorder %s147, %s148
      %p157 = scmp.eq.s32.totalorder %s27, 0
      %p158 = por %p156, %p157
      %p159 = scmp.ne.s32.totalorder %s147, %s148
      %p160 = scmp.eq.s32.totalorder %s28, 1
      %p161 = por %p159, %p160
      %p163 = scmp.ne.s32.totalorder %s148, %s162
      %p164 = scmp.eq.s32.totalorder %s28, 0
      %p165 = por %p163, %p164
      %s167 = sadd.s32 %s166, 1
      %p170 = scmp.eq.s32.totalorder %s22, 1
      %p171 = scmp.ne.s32.totalorder %s166, %s168
      %p172 = scmp.eq.s32.totalorder %s22, 0
      %p173 = por %p171, %p172
      %p174 = scmp.ne.s32.totalorder %s166, %s168
      %p175 = scmp.eq.s32.totalorder %s27, 1
      %p176 = por %p174, %p175
      %p177 = scmp.ne.s32.totalorder %s168, %s169
      %p178 = scmp.eq.s32.totalorder %s27, 0
      %p179 = por %p177, %p178
      %p180 = scmp.ne.s32.totalorder %s168, %s169
      %p181 = scmp.eq.s32.totalorder %s28, 1
      %p182 = por %p180, %p181
      %p184 = scmp.ne.s32.totalorder %s169, %s183
      %p185 = scmp.eq.s32.totalorder %s28, 0
      %p186 = por %p184, %p185
      %s187 = ssub.s32 %s22, %s29
      %p188 = scmp.eq.s32.totalorder %s187, 0
      %s190 = sadd.s32 %s189, 1
      %s191 = scalar_select %p188, %s189, %s190
      %p194 = pneg %p188
      %p195 = scmp.eq.s32.totalorder %s22, 1
      %p196 = por %p194, %p195
      %p197 = scmp.ne.s32.totalorder %s189, %s192
      %p198 = scmp.eq.s32.totalorder %s22, 0
      %p199 = por %p197, %p198
      %p200 = scmp.ne.s32.totalorder %s189, %s192
      %p201 = scmp.eq.s32.totalorder %s27, 1
      %p202 = por %p200, %p201
      %p203 = scmp.ne.s32.totalorder %s192, %s193
      %p204 = scmp.eq.s32.totalorder %s27, 0
      %p205 = por %p203, %p204
      %p206 = scmp.ne.s32.totalorder %s192, %s193
      %p207 = scmp.eq.s32.totalorder %s28, 1
      %p208 = por %p206, %p207
      %p210 = scmp.ne.s32.totalorder %s193, %s209
      %p211 = scmp.eq.s32.totalorder %s28, 0
      %p212 = por %p210, %p211
      %p213 = scmp.le.s32.totalorder 1, %s22
      %p214 = scmp.lt.s32.totalorder %s22, 3
      %p215 = pnand %p213, %p214
      %p216 = pneg %p215
      // Predicated region
      $region9: #{tpu_custom_call.1} parent=5 // pred_check
        _
      $region10: #{tpu_custom_call.1} parent=5 // pred_check_branch
        %218 = sbr.rel (%p215) target = $region12
      $region11: #{tpu_custom_call.1} parent=5 // pred_region
        %s219 = ssub.s32 %s22, 1
        // Predicated region
        $region13: #{tpu_custom_call.1} parent=11 // pred_check
          %p220 = pneg %p95
        $region14: #{tpu_custom_call.1} parent=11 // pred_check_branch
          %222 = sbr.rel (%p220) target = $region16
        $region15: #{tpu_custom_call.1} parent=11 // pred_region
          _
        $region16: #{tpu_custom_call.1} parent=11 // pred_fallthru
          _
        // Predicated region
        $region17: #{tpu_custom_call.1} parent=11 // pred_check
          %p223 = pneg %p116
        $region18: #{tpu_custom_call.1} parent=11 // pred_check_branch
          %225 = sbr.rel (%p223) target = $region20
        $region19: #{tpu_custom_call.1} parent=11 // pred_region
          _
        $region20: #{tpu_custom_call.1} parent=11 // pred_fallthru
          _
        // Predicated region
        $region21: #{tpu_custom_call.1} parent=11 // pred_check
          %p226 = pneg %p137
        $region22: #{tpu_custom_call.1} parent=11 // pred_check_branch
          %228 = sbr.rel (%p226) target = $region24
        $region23: #{tpu_custom_call.1} parent=11 // pred_region
          _
        $region24: #{tpu_custom_call.1} parent=11 // pred_fallthru
          _
        // Predicated region
        $region25: #{tpu_custom_call.1} parent=11 // pred_check
          %p229 = pneg %p158
        $region26: #{tpu_custom_call.1} parent=11 // pred_check_branch
          %231 = sbr.rel (%p229) target = $region28
        $region27: #{tpu_custom_call.1} parent=11 // pred_region
          _
        $region28: #{tpu_custom_call.1} parent=11 // pred_fallthru
          _
        // Predicated region
        $region29: #{tpu_custom_call.1} parent=11 // pred_check
          %p232 = pneg %p179
        $region30: #{tpu_custom_call.1} parent=11 // pred_check_branch
          %234 = sbr.rel (%p232) target = $region32
        $region31: #{tpu_custom_call.1} parent=11 // pred_region
          _
        $region32: #{tpu_custom_call.1} parent=11 // pred_fallthru
          _
      $region12: #{tpu_custom_call.1} parent=5 // pred_fallthru
        _
      %p235 = scmp.lt.s32.totalorder %s22, 2
      // Predicated region
      $region33: #{tpu_custom_call.1} parent=5 // pred_check
        %p236 = pneg %p235
      $region34: #{tpu_custom_call.1} parent=5 // pred_check_branch
        %238 = sbr.rel (%p236) target = $region36
      $region35: #{tpu_custom_call.1} parent=5 // pred_region
        // Predicated region
        $region37: #{tpu_custom_call.1} parent=35 // pred_check
          %p239 = pneg %p42
        $region38: #{tpu_custom_call.1} parent=35 // pred_check_branch
          %241 = sbr.rel (%p239) target = $region40
        $region39: #{tpu_custom_call.1} parent=35 // pred_region
          %s242 = sand.u32 %s32, 1
          %s243 = scalar_lea.sflag [#allocation3], %s242
          %s244 = sand.u32 %s32, 1
          %s245 = smul.addr %s244, 64
          %s246 = scalar_lea.vmem [#allocation2], %s245
          %s248 = ssub.s32 1024, 1024
          %249 = vsyncadd %s243, %s248
          %s250 = smul.addr %s22, 8
          %s251 = smul.addr %s250, 128
          %s252 = scalar_lea.hbm %s0, %s251
          %s253 = sshll.u32 %s246, 4
          %s254 = int_to_ptr.vmem [resolvable:$true] %s253
          %259 = dma.hbm_to_vmem [thread:$0]  %s252, 1024, %s254, %s243, 256, 256, 16
        $region40: #{tpu_custom_call.1} parent=35 // pred_fallthru
          _
        // Predicated region
        $region41: #{tpu_custom_call.1} parent=35 // pred_check
          %p260 = pneg %p68
        $region42: #{tpu_custom_call.1} parent=35 // pred_check_branch
          %262 = sbr.rel (%p260) target = $region44
        $region43: #{tpu_custom_call.1} parent=35 // pred_region
          %s263 = sand.u32 %s58, 1
          %s264 = scalar_lea.sflag [#allocation6], %s263
          %s265 = sand.u32 %s58, 1
          %s266 = smul.addr %s265, 64
          %s267 = scalar_lea.vmem [#allocation5], %s266
          %s269 = ssub.s32 1024, 1024
          %270 = vsyncadd %s264, %s269
          %s271 = smul.addr %s22, 8
          %s272 = smul.addr %s271, 128
          %s273 = scalar_lea.hbm %s1, %s272
          %s274 = sshll.u32 %s267, 4
          %s275 = int_to_ptr.vmem [resolvable:$true] %s274
          %280 = dma.hbm_to_vmem [thread:$0]  %s273, 1024, %s275, %s264, 256, 256, 16
        $region44: #{tpu_custom_call.1} parent=35 // pred_fallthru
          _
      $region36: #{tpu_custom_call.1} parent=5 // pred_fallthru
        _
      %p281 = scmp.le.s32.totalorder 1, %s22
      %p282 = scmp.lt.s32.totalorder %s22, 3
      %p283 = pnand %p281, %p282
      %p284 = pneg %p283
      // Predicated region
      $region45: #{tpu_custom_call.1} parent=5 // pred_check
        _
      $region46: #{tpu_custom_call.1} parent=5 // pred_check_branch
        %286 = sbr.rel (%p283) target = $region48
      $region47: #{tpu_custom_call.1} parent=5 // pred_region
        %s287 = ssub.s32 %s22, 1
        %s288 = sand.u32 %s35, 1
        %s289 = scalar_lea.sflag [#allocation3], %s288
        %s290 = sand.u32 %s35, 1
        %s291 = smul.addr %s290, 64
        %s292 = scalar_lea.vmem [#allocation2], %s291
        // Predicated region
        $region49: #{tpu_custom_call.1} parent=47 // pred_check
          %p293 = pneg %p48
        $region50: #{tpu_custom_call.1} parent=47 // pred_check_branch
          %295 = sbr.rel (%p293) target = $region52
        $region51: #{tpu_custom_call.1} parent=47 // pred_region
          %296 = dma.done %s289, 1024
        $region52: #{tpu_custom_call.1} parent=47 // pred_fallthru
          _
        %s297 = sand.u32 %s61, 1
        %s298 = scalar_lea.sflag [#allocation6], %s297
        %s299 = sand.u32 %s61, 1
        %s300 = smul.addr %s299, 64
        %s301 = scalar_lea.vmem [#allocation5], %s300
        // Predicated region
        $region53: #{tpu_custom_call.1} parent=47 // pred_check
          %p302 = pneg %p74
        $region54: #{tpu_custom_call.1} parent=47 // pred_check_branch
          %304 = sbr.rel (%p302) target = $region56
        $region55: #{tpu_custom_call.1} parent=47 // pred_region
          %305 = dma.done %s298, 1024
        $region56: #{tpu_custom_call.1} parent=47 // pred_fallthru
          _
        %s306 = sand.u32 %s35, 1
        %s307 = scalar_lea.sflag [#allocation3], %s306
        %s308 = sand.u32 %s35, 1
        %s309 = smul.addr %s308, 64
        %s310 = scalar_lea.vmem [#allocation2], %s309
        %p311 = pneg %p48
        %p312 = pneg %p45
        %s313 = sand.u32 %s61, 1
        %s314 = scalar_lea.sflag [#allocation6], %s313
        %s315 = sand.u32 %s61, 1
        %s316 = smul.addr %s315, 64
        %s317 = scalar_lea.vmem [#allocation5], %s316
        %p318 = pneg %p74
        %p319 = pneg %p71
        %p320 = pneg %p95
        %p321 = pneg %p92
        %p322 = pneg %p116
        %p323 = pneg %p113
        %p324 = pneg %p137
        %p325 = pneg %p134
        %p326 = pneg %p158
        %p327 = pneg %p155
        %p328 = pneg %p179
        %p329 = pneg %p176
        %p330 = pneg %p205
        %p331 = pneg %p202
        %s332 = sand.u32 %s192, 1
        %s333 = scalar_lea.sflag [#allocation4], %s332
        %s334 = sand.u32 %s192, 1
        %s335 = smul.addr %s334, 64
        %s336 = scalar_lea.vmem [#allocation7], %s335
        %v337 = vld [vmem:[%s292] sm:$0xff]
        %v338 = vld [vmem:[%s292 + $0x8] sm:$0xff]
        %v339 = vld [vmem:[%s292 + $0x10] sm:$0xff]
        %v340 = vld [vmem:[%s292 + $0x18] sm:$0xff]
        %v341 = vld [vmem:[%s292 + $0x20] sm:$0xff]
        %v342 = vld [vmem:[%s292 + $0x28] sm:$0xff]
        %v343 = vld [vmem:[%s292 + $0x30] sm:$0xff]
        %v344 = vld [vmem:[%s292 + $0x38] sm:$0xff]
        %v345 = vld [vmem:[%s301] sm:$0xff]
        %v346 = vld [vmem:[%s301 + $0x8] sm:$0xff]
        %v347 = vld [vmem:[%s301 + $0x10] sm:$0xff]
        %v348 = vld [vmem:[%s301 + $0x18] sm:$0xff]
        %v349 = vld [vmem:[%s301 + $0x20] sm:$0xff]
        %v350 = vld [vmem:[%s301 + $0x28] sm:$0xff]
        %v351 = vld [vmem:[%s301 + $0x30] sm:$0xff]
        %v352 = vld [vmem:[%s301 + $0x38] sm:$0xff]
        %357 = vrot.lane.b32.xlu0 %v337, 64
        %v358 = vpop.permute.xlu0 %357
        %359 = vrot.lane.b32.xlu0 %v339, 64
        %v360 = vpop.permute.xlu0 %359
        %361 = vrot.lane.b32.xlu0 %v341, 64
        %v362 = vpop.permute.xlu0 %361
        %363 = vrot.lane.b32.xlu0 %v343, 64
        %v364 = vpop.permute.xlu0 %363
        %373 = vrot.lane.b32.xlu0 %v338, 64
        %v374 = vpop.permute.xlu0 %373
        %375 = vrot.lane.b32.xlu0 %v340, 64
        %v376 = vpop.permute.xlu0 %375
        %377 = vrot.lane.b32.xlu0 %v342, 64
        %v378 = vpop.permute.xlu0 %377
        %379 = vrot.lane.b32.xlu0 %v344, 64
        %v380 = vpop.permute.xlu0 %379
        %v385 = vcombine.low %v337, %v338
        %v386 = vcombine.high %v337, %v338
        %v388 = vunpack.c.l.s4 1983009808
        %v389 = vunpack.c.0.s8 %v388
        %v390 = vlaneseq
        %v391 = vshrl.u32 %v390, 7
        %v392 = vsub.s32 %v389, %v391
        %v393 = vrot.slane %v385, %v392
        %v395 = vunpack.c.l.s4 1983009808
        %v396 = vunpack.c.0.s8 %v395
        %v397 = vlaneseq
        %v398 = vshrl.u32 %v397, 7
        %v399 = vsub.s32 %v396, %v398
        %v400 = vrot.slane %v386, %v399
        %v401 = vcombine.low %v358, %v374
        %v402 = vcombine.high %v358, %v374
        %v404 = vunpack.c.l.s4 1983009808
        %v405 = vunpack.c.0.s8 %v404
        %v406 = vlaneseq
        %v407 = vshrl.u32 %v406, 7
        %v408 = vsub.s32 %v405, %v407
        %v409 = vrot.slane %v401, %v408
        %v411 = vunpack.c.l.s4 1983009808
        %v412 = vunpack.c.0.s8 %v411
        %v413 = vlaneseq
        %v414 = vshrl.u32 %v413, 7
        %v415 = vsub.s32 %v412, %v414
        %v416 = vrot.slane %v402, %v415
        %v417 = vcombine.low %v393, %v409
        %v418 = vcombine.high %v393, %v409
        %v420 = vunpack.c.l.s4 1934713408
        %v421 = vunpack.c.0.s8 %v420
        %v422 = vlaneseq
        %v423 = vshrl.u32 %v422, 7
        %v424 = vsub.s32 %v421, %v423
        %v425 = vrot.slane %v417, %v424
        %v427 = vunpack.c.l.s4 1934713408
        %v428 = vunpack.c.0.s8 %v427
        %v429 = vlaneseq
        %v430 = vshrl.u32 %v429, 7
        %v431 = vsub.s32 %v428, %v430
        %v432 = vrot.slane %v418, %v431
        %v433 = vcombine.low %v400, %v416
        %v434 = vcombine.high %v400, %v416
        %v436 = vunpack.c.l.s4 1934713408
        %v437 = vunpack.c.0.s8 %v436
        %v438 = vlaneseq
        %v439 = vshrl.u32 %v438, 7
        %v440 = vsub.s32 %v437, %v439
        %v441 = vrot.slane %v433, %v440
        %v443 = vunpack.c.l.s4 1934713408
        %v444 = vunpack.c.0.s8 %v443
        %v445 = vlaneseq
        %v446 = vshrl.u32 %v445, 7
        %v447 = vsub.s32 %v444, %v446
        %v448 = vrot.slane %v434, %v447
        %v449 = vcombine.high %v425, 0.0
        %v450 = vcombine.high %v432, 0.0
        %v451 = vcombine.high %v441, 0.0
        %v452 = vcombine.high %v448, 0.0
        %v453 = vcombine.low %v339, %v340
        %v454 = vcombine.high %v339, %v340
        %v456 = vunpack.c.l.s4 1983009808
        %v457 = vunpack.c.0.s8 %v456
        %v458 = vlaneseq
        %v459 = vshrl.u32 %v458, 7
        %v460 = vsub.s32 %v457, %v459
        %v461 = vrot.slane %v453, %v460
        %v463 = vunpack.c.l.s4 1983009808
        %v464 = vunpack.c.0.s8 %v463
        %v465 = vlaneseq
        %v466 = vshrl.u32 %v465, 7
        %v467 = vsub.s32 %v464, %v466
        %v468 = vrot.slane %v454, %v467
        %v469 = vcombine.low %v360, %v376
        %v470 = vcombine.high %v360, %v376
        %v472 = vunpack.c.l.s4 1983009808
        %v473 = vunpack.c.0.s8 %v472
        %v474 = vlaneseq
        %v475 = vshrl.u32 %v474, 7
        %v476 = vsub.s32 %v473, %v475
        %v477 = vrot.slane %v469, %v476
        %v479 = vunpack.c.l.s4 1983009808
        %v480 = vunpack.c.0.s8 %v479
        %v481 = vlaneseq
        %v482 = vshrl.u32 %v481, 7
        %v483 = vsub.s32 %v480, %v482
        %v484 = vrot.slane %v470, %v483
        %v485 = vcombine.low %v461, %v477
        %v486 = vcombine.high %v461, %v477
        %v488 = vunpack.c.l.s4 1934713408
        %v489 = vunpack.c.0.s8 %v488
        %v490 = vlaneseq
        %v491 = vshrl.u32 %v490, 7
        %v492 = vsub.s32 %v489, %v491
        %v493 = vrot.slane %v485, %v492
        %v495 = vunpack.c.l.s4 1934713408
        %v496 = vunpack.c.0.s8 %v495
        %v497 = vlaneseq
        %v498 = vshrl.u32 %v497, 7
        %v499 = vsub.s32 %v496, %v498
        %v500 = vrot.slane %v486, %v499
        %v501 = vcombine.low %v468, %v484
        %v502 = vcombine.high %v468, %v484
        %v504 = vunpack.c.l.s4 1934713408
        %v505 = vunpack.c.0.s8 %v504
        %v506 = vlaneseq
        %v507 = vshrl.u32 %v506, 7
        %v508 = vsub.s32 %v505, %v507
        %v509 = vrot.slane %v501, %v508
        %v511 = vunpack.c.l.s4 1934713408
        %v512 = vunpack.c.0.s8 %v511
        %v513 = vlaneseq
        %v514 = vshrl.u32 %v513, 7
        %v515 = vsub.s32 %v512, %v514
        %v516 = vrot.slane %v502, %v515
        %v517 = vcombine.high %v493, 0.0
        %v518 = vcombine.high %v500, 0.0
        %v519 = vcombine.high %v509, 0.0
        %v520 = vcombine.high %v516, 0.0
        %v521 = vcombine.low %v341, %v342
        %v522 = vcombine.high %v341, %v342
        %v524 = vunpack.c.l.s4 1983009808
        %v525 = vunpack.c.0.s8 %v524
        %v526 = vlaneseq
        %v527 = vshrl.u32 %v526, 7
        %v528 = vsub.s32 %v525, %v527
        %v529 = vrot.slane %v521, %v528
        %v531 = vunpack.c.l.s4 1983009808
        %v532 = vunpack.c.0.s8 %v531
        %v533 = vlaneseq
        %v534 = vshrl.u32 %v533, 7
        %v535 = vsub.s32 %v532, %v534
        %v536 = vrot.slane %v522, %v535
        %v537 = vcombine.low %v362, %v378
        %v538 = vcombine.high %v362, %v378
        %v540 = vunpack.c.l.s4 1983009808
        %v541 = vunpack.c.0.s8 %v540
        %v542 = vlaneseq
        %v543 = vshrl.u32 %v542, 7
        %v544 = vsub.s32 %v541, %v543
        %v545 = vrot.slane %v537, %v544
        %v547 = vunpack.c.l.s4 1983009808
        %v548 = vunpack.c.0.s8 %v547
        %v549 = vlaneseq
        %v550 = vshrl.u32 %v549, 7
        %v551 = vsub.s32 %v548, %v550
        %v552 = vrot.slane %v538, %v551
        %v553 = vcombine.low %v529, %v545
        %v554 = vcombine.high %v529, %v545
        %v556 = vunpack.c.l.s4 1934713408
        %v557 = vunpack.c.0.s8 %v556
        %v558 = vlaneseq
        %v559 = vshrl.u32 %v558, 7
        %v560 = vsub.s32 %v557, %v559
        %v561 = vrot.slane %v553, %v560
        %v563 = vunpack.c.l.s4 1934713408
        %v564 = vunpack.c.0.s8 %v563
        %v565 = vlaneseq
        %v566 = vshrl.u32 %v565, 7
        %v567 = vsub.s32 %v564, %v566
        %v568 = vrot.slane %v554, %v567
        %v569 = vcombine.low %v536, %v552
        %v570 = vcombine.high %v536, %v552
        %v572 = vunpack.c.l.s4 1934713408
        %v573 = vunpack.c.0.s8 %v572
        %v574 = vlaneseq
        %v575 = vshrl.u32 %v574, 7
        %v576 = vsub.s32 %v573, %v575
        %v577 = vrot.slane %v569, %v576
        %v579 = vunpack.c.l.s4 1934713408
        %v580 = vunpack.c.0.s8 %v579
        %v581 = vlaneseq
        %v582 = vshrl.u32 %v581, 7
        %v583 = vsub.s32 %v580, %v582
        %v584 = vrot.slane %v570, %v583
        %v585 = vcombine.high %v561, 0.0
        %v586 = vcombine.high %v568, 0.0
        %v587 = vcombine.high %v577, 0.0
        %v588 = vcombine.high %v584, 0.0
        %v589 = vcombine.low %v343, %v344
        %v590 = vcombine.high %v343, %v344
        %v592 = vunpack.c.l.s4 1983009808
        %v593 = vunpack.c.0.s8 %v592
        %v594 = vlaneseq
        %v595 = vshrl.u32 %v594, 7
        %v596 = vsub.s32 %v593, %v595
        %v597 = vrot.slane %v589, %v596
        %v599 = vunpack.c.l.s4 1983009808
        %v600 = vunpack.c.0.s8 %v599
        %v601 = vlaneseq
        %v602 = vshrl.u32 %v601, 7
        %v603 = vsub.s32 %v600, %v602
        %v604 = vrot.slane %v590, %v603
        %v605 = vcombine.low %v364, %v380
        %v606 = vcombine.high %v364, %v380
        %v608 = vunpack.c.l.s4 1983009808
        %v609 = vunpack.c.0.s8 %v608
        %v610 = vlaneseq
        %v611 = vshrl.u32 %v610, 7
        %v612 = vsub.s32 %v609, %v611
        %v613 = vrot.slane %v605, %v612
        %v615 = vunpack.c.l.s4 1983009808
        %v616 = vunpack.c.0.s8 %v615
        %v617 = vlaneseq
        %v618 = vshrl.u32 %v617, 7
        %v619 = vsub.s32 %v616, %v618
        %v620 = vrot.slane %v606, %v619
        %v621 = vcombine.low %v597, %v613
        %v622 = vcombine.high %v597, %v613
        %v624 = vunpack.c.l.s4 1934713408
        %v625 = vunpack.c.0.s8 %v624
        %v626 = vlaneseq
        %v627 = vshrl.u32 %v626, 7
        %v628 = vsub.s32 %v625, %v627
        %v629 = vrot.slane %v621, %v628
        %v631 = vunpack.c.l.s4 1934713408
        %v632 = vunpack.c.0.s8 %v631
        %v633 = vlaneseq
        %v634 = vshrl.u32 %v633, 7
        %v635 = vsub.s32 %v632, %v634
        %v636 = vrot.slane %v622, %v635
        %v637 = vcombine.low %v604, %v620
        %v638 = vcombine.high %v604, %v620
        %v640 = vunpack.c.l.s4 1934713408
        %v641 = vunpack.c.0.s8 %v640
        %v642 = vlaneseq
        %v643 = vshrl.u32 %v642, 7
        %v644 = vsub.s32 %v641, %v643
        %v645 = vrot.slane %v637, %v644
        %v647 = vunpack.c.l.s4 1934713408
        %v648 = vunpack.c.0.s8 %v647
        %v649 = vlaneseq
        %v650 = vshrl.u32 %v649, 7
        %v651 = vsub.s32 %v648, %v650
        %v652 = vrot.slane %v638, %v651
        %v653 = vcombine.high %v629, 0.0
        %v654 = vcombine.high %v636, 0.0
        %v655 = vcombine.high %v645, 0.0
        %v656 = vcombine.high %v652, 0.0
        %661 = vrot.lane.b32.xlu0 %v345, 64
        %v662 = vpop.permute.xlu0 %661
        %663 = vrot.lane.b32.xlu0 %v347, 64
        %v664 = vpop.permute.xlu0 %663
        %665 = vrot.lane.b32.xlu0 %v349, 64
        %v666 = vpop.permute.xlu0 %665
        %667 = vrot.lane.b32.xlu0 %v351, 64
        %v668 = vpop.permute.xlu0 %667
        %677 = vrot.lane.b32.xlu0 %v346, 64
        %v678 = vpop.permute.xlu0 %677
        %679 = vrot.lane.b32.xlu0 %v348, 64
        %v680 = vpop.permute.xlu0 %679
        %681 = vrot.lane.b32.xlu0 %v350, 64
        %v682 = vpop.permute.xlu0 %681
        %683 = vrot.lane.b32.xlu0 %v352, 64
        %v684 = vpop.permute.xlu0 %683
        %v689 = vcombine.low %v345, %v346
        %v690 = vcombine.high %v345, %v346
        %v692 = vunpack.c.l.s4 1983009808
        %v693 = vunpack.c.0.s8 %v692
        %v694 = vlaneseq
        %v695 = vshrl.u32 %v694, 7
        %v696 = vsub.s32 %v693, %v695
        %v697 = vrot.slane %v689, %v696
        %v699 = vunpack.c.l.s4 1983009808
        %v700 = vunpack.c.0.s8 %v699
        %v701 = vlaneseq
        %v702 = vshrl.u32 %v701, 7
        %v703 = vsub.s32 %v700, %v702
        %v704 = vrot.slane %v690, %v703
        %v705 = vcombine.low %v662, %v678
        %v706 = vcombine.high %v662, %v678
        %v708 = vunpack.c.l.s4 1983009808
        %v709 = vunpack.c.0.s8 %v708
        %v710 = vlaneseq
        %v711 = vshrl.u32 %v710, 7
        %v712 = vsub.s32 %v709, %v711
        %v713 = vrot.slane %v705, %v712
        %v715 = vunpack.c.l.s4 1983009808
        %v716 = vunpack.c.0.s8 %v715
        %v717 = vlaneseq
        %v718 = vshrl.u32 %v717, 7
        %v719 = vsub.s32 %v716, %v718
        %v720 = vrot.slane %v706, %v719
        %v721 = vcombine.low %v697, %v713
        %v722 = vcombine.high %v697, %v713
        %v724 = vunpack.c.l.s4 1934713408
        %v725 = vunpack.c.0.s8 %v724
        %v726 = vlaneseq
        %v727 = vshrl.u32 %v726, 7
        %v728 = vsub.s32 %v725, %v727
        %v729 = vrot.slane %v721, %v728
        %v731 = vunpack.c.l.s4 1934713408
        %v732 = vunpack.c.0.s8 %v731
        %v733 = vlaneseq
        %v734 = vshrl.u32 %v733, 7
        %v735 = vsub.s32 %v732, %v734
        %v736 = vrot.slane %v722, %v735
        %v737 = vcombine.low %v704, %v720
        %v738 = vcombine.high %v704, %v720
        %v740 = vunpack.c.l.s4 1934713408
        %v741 = vunpack.c.0.s8 %v740
        %v742 = vlaneseq
        %v743 = vshrl.u32 %v742, 7
        %v744 = vsub.s32 %v741, %v743
        %v745 = vrot.slane %v737, %v744
        %v747 = vunpack.c.l.s4 1934713408
        %v748 = vunpack.c.0.s8 %v747
        %v749 = vlaneseq
        %v750 = vshrl.u32 %v749, 7
        %v751 = vsub.s32 %v748, %v750
        %v752 = vrot.slane %v738, %v751
        %v753 = vcombine.high %v729, 0.0
        %v754 = vcombine.high %v736, 0.0
        %v755 = vcombine.high %v745, 0.0
        %v756 = vcombine.high %v752, 0.0
        %v757 = vcombine.low %v347, %v348
        %v758 = vcombine.high %v347, %v348
        %v760 = vunpack.c.l.s4 1983009808
        %v761 = vunpack.c.0.s8 %v760
        %v762 = vlaneseq
        %v763 = vshrl.u32 %v762, 7
        %v764 = vsub.s32 %v761, %v763
        %v765 = vrot.slane %v757, %v764
        %v767 = vunpack.c.l.s4 1983009808
        %v768 = vunpack.c.0.s8 %v767
        %v769 = vlaneseq
        %v770 = vshrl.u32 %v769, 7
        %v771 = vsub.s32 %v768, %v770
        %v772 = vrot.slane %v758, %v771
        %v773 = vcombine.low %v664, %v680
        %v774 = vcombine.high %v664, %v680
        %v776 = vunpack.c.l.s4 1983009808
        %v777 = vunpack.c.0.s8 %v776
        %v778 = vlaneseq
        %v779 = vshrl.u32 %v778, 7
        %v780 = vsub.s32 %v777, %v779
        %v781 = vrot.slane %v773, %v780
        %v783 = vunpack.c.l.s4 1983009808
        %v784 = vunpack.c.0.s8 %v783
        %v785 = vlaneseq
        %v786 = vshrl.u32 %v785, 7
        %v787 = vsub.s32 %v784, %v786
        %v788 = vrot.slane %v774, %v787
        %v789 = vcombine.low %v765, %v781
        %v790 = vcombine.high %v765, %v781
        %v792 = vunpack.c.l.s4 1934713408
        %v793 = vunpack.c.0.s8 %v792
        %v794 = vlaneseq
        %v795 = vshrl.u32 %v794, 7
        %v796 = vsub.s32 %v793, %v795
        %v797 = vrot.slane %v789, %v796
        %v799 = vunpack.c.l.s4 1934713408
        %v800 = vunpack.c.0.s8 %v799
        %v801 = vlaneseq
        %v802 = vshrl.u32 %v801, 7
        %v803 = vsub.s32 %v800, %v802
        %v804 = vrot.slane %v790, %v803
        %v805 = vcombine.low %v772, %v788
        %v806 = vcombine.high %v772, %v788
        %v808 = vunpack.c.l.s4 1934713408
        %v809 = vunpack.c.0.s8 %v808
        %v810 = vlaneseq
        %v811 = vshrl.u32 %v810, 7
        %v812 = vsub.s32 %v809, %v811
        %v813 = vrot.slane %v805, %v812
        %v815 = vunpack.c.l.s4 1934713408
        %v816 = vunpack.c.0.s8 %v815
        %v817 = vlaneseq
        %v818 = vshrl.u32 %v817, 7
        %v819 = vsub.s32 %v816, %v818
        %v820 = vrot.slane %v806, %v819
        %v821 = vcombine.high %v797, 0.0
        %v822 = vcombine.high %v804, 0.0
        %v823 = vcombine.high %v813, 0.0
        %v824 = vcombine.high %v820, 0.0
        %v825 = vcombine.low %v349, %v350
        %v826 = vcombine.high %v349, %v350
        %v828 = vunpack.c.l.s4 1983009808
        %v829 = vunpack.c.0.s8 %v828
        %v830 = vlaneseq
        %v831 = vshrl.u32 %v830, 7
        %v832 = vsub.s32 %v829, %v831
        %v833 = vrot.slane %v825, %v832
        %v835 = vunpack.c.l.s4 1983009808
        %v836 = vunpack.c.0.s8 %v835
        %v837 = vlaneseq
        %v838 = vshrl.u32 %v837, 7
        %v839 = vsub.s32 %v836, %v838
        %v840 = vrot.slane %v826, %v839
        %v841 = vcombine.low %v666, %v682
        %v842 = vcombine.high %v666, %v682
        %v844 = vunpack.c.l.s4 1983009808
        %v845 = vunpack.c.0.s8 %v844
        %v846 = vlaneseq
        %v847 = vshrl.u32 %v846, 7
        %v848 = vsub.s32 %v845, %v847
        %v849 = vrot.slane %v841, %v848
        %v851 = vunpack.c.l.s4 1983009808
        %v852 = vunpack.c.0.s8 %v851
        %v853 = vlaneseq
        %v854 = vshrl.u32 %v853, 7
        %v855 = vsub.s32 %v852, %v854
        %v856 = vrot.slane %v842, %v855
        %v857 = vcombine.low %v833, %v849
        %v858 = vcombine.high %v833, %v849
        %v860 = vunpack.c.l.s4 1934713408
        %v861 = vunpack.c.0.s8 %v860
        %v862 = vlaneseq
        %v863 = vshrl.u32 %v862, 7
        %v864 = vsub.s32 %v861, %v863
        %v865 = vrot.slane %v857, %v864
        %v867 = vunpack.c.l.s4 1934713408
        %v868 = vunpack.c.0.s8 %v867
        %v869 = vlaneseq
        %v870 = vshrl.u32 %v869, 7
        %v871 = vsub.s32 %v868, %v870
        %v872 = vrot.slane %v858, %v871
        %v873 = vcombine.low %v840, %v856
        %v874 = vcombine.high %v840, %v856
        %v876 = vunpack.c.l.s4 1934713408
        %v877 = vunpack.c.0.s8 %v876
        %v878 = vlaneseq
        %v879 = vshrl.u32 %v878, 7
        %v880 = vsub.s32 %v877, %v879
        %v881 = vrot.slane %v873, %v880
        %v883 = vunpack.c.l.s4 1934713408
        %v884 = vunpack.c.0.s8 %v883
        %v885 = vlaneseq
        %v886 = vshrl.u32 %v885, 7
        %v887 = vsub.s32 %v884, %v886
        %v888 = vrot.slane %v874, %v887
        %v889 = vcombine.high %v865, 0.0
        %v890 = vcombine.high %v872, 0.0
        %v891 = vcombine.high %v881, 0.0
        %v892 = vcombine.high %v888, 0.0
        %v893 = vcombine.low %v351, %v352
        %v894 = vcombine.high %v351, %v352
        %v896 = vunpack.c.l.s4 1983009808
        %v897 = vunpack.c.0.s8 %v896
        %v898 = vlaneseq
        %v899 = vshrl.u32 %v898, 7
        %v900 = vsub.s32 %v897, %v899
        %v901 = vrot.slane %v893, %v900
        %v903 = vunpack.c.l.s4 1983009808
        %v904 = vunpack.c.0.s8 %v903
        %v905 = vlaneseq
        %v906 = vshrl.u32 %v905, 7
        %v907 = vsub.s32 %v904, %v906
        %v908 = vrot.slane %v894, %v907
        %v909 = vcombine.low %v668, %v684
        %v910 = vcombine.high %v668, %v684
        %v912 = vunpack.c.l.s4 1983009808
        %v913 = vunpack.c.0.s8 %v912
        %v914 = vlaneseq
        %v915 = vshrl.u32 %v914, 7
        %v916 = vsub.s32 %v913, %v915
        %v917 = vrot.slane %v909, %v916
        %v919 = vunpack.c.l.s4 1983009808
        %v920 = vunpack.c.0.s8 %v919
        %v921 = vlaneseq
        %v922 = vshrl.u32 %v921, 7
        %v923 = vsub.s32 %v920, %v922
        %v924 = vrot.slane %v910, %v923
        %v925 = vcombine.low %v901, %v917
        %v926 = vcombine.high %v901, %v917
        %v928 = vunpack.c.l.s4 1934713408
        %v929 = vunpack.c.0.s8 %v928
        %v930 = vlaneseq
        %v931 = vshrl.u32 %v930, 7
        %v932 = vsub.s32 %v929, %v931
        %v933 = vrot.slane %v925, %v932
        %v935 = vunpack.c.l.s4 1934713408
        %v936 = vunpack.c.0.s8 %v935
        %v937 = vlaneseq
        %v938 = vshrl.u32 %v937, 7
        %v939 = vsub.s32 %v936, %v938
        %v940 = vrot.slane %v926, %v939
        %v941 = vcombine.low %v908, %v924
        %v942 = vcombine.high %v908, %v924
        %v944 = vunpack.c.l.s4 1934713408
        %v945 = vunpack.c.0.s8 %v944
        %v946 = vlaneseq
        %v947 = vshrl.u32 %v946, 7
        %v948 = vsub.s32 %v945, %v947
        %v949 = vrot.slane %v941, %v948
        %v951 = vunpack.c.l.s4 1934713408
        %v952 = vunpack.c.0.s8 %v951
        %v953 = vlaneseq
        %v954 = vshrl.u32 %v953, 7
        %v955 = vsub.s32 %v952, %v954
        %v956 = vrot.slane %v942, %v955
        %v957 = vcombine.high %v933, 0.0
        %v958 = vcombine.high %v940, 0.0
        %v959 = vcombine.high %v949, 0.0
        %v960 = vcombine.high %v956, 0.0
        %vm961 = vcmask 519168
        %v962 = vsel %vm961, %v425, 0.0
        %963 = vadd.xlane.f32.xlu0 %v962
        %v964 = vpop.xlane.xlu0 %963
        %v965 = vsel %vm961, %v449, 0.0
        %966 = vadd.xlane.f32.xlu0 %v965
        %v967 = vpop.xlane.xlu0 %966
        %v968 = vsel %vm961, %v432, 0.0
        %969 = vadd.xlane.f32.xlu0 %v968
        %v970 = vpop.xlane.xlu0 %969
        %v971 = vsel %vm961, %v450, 0.0
        %972 = vadd.xlane.f32.xlu0 %v971
        %v973 = vpop.xlane.xlu0 %972
        %v974 = vsel %vm961, %v441, 0.0
        %975 = vadd.xlane.f32.xlu0 %v974
        %v976 = vpop.xlane.xlu0 %975
        %v977 = vsel %vm961, %v451, 0.0
        %978 = vadd.xlane.f32.xlu0 %v977
        %v979 = vpop.xlane.xlu0 %978
        %v980 = vsel %vm961, %v448, 0.0
        %981 = vadd.xlane.f32.xlu0 %v980
        %v982 = vpop.xlane.xlu0 %981
        %v983 = vsel %vm961, %v452, 0.0
        %984 = vadd.xlane.f32.xlu0 %v983
        %v985 = vpop.xlane.xlu0 %984
        %v986 = vsel %vm961, %v493, 0.0
        %987 = vadd.xlane.f32.xlu0 %v986
        %v988 = vpop.xlane.xlu0 %987
        %v989 = vsel %vm961, %v517, 0.0
        %990 = vadd.xlane.f32.xlu0 %v989
        %v991 = vpop.xlane.xlu0 %990
        %v992 = vsel %vm961, %v500, 0.0
        %993 = vadd.xlane.f32.xlu0 %v992
        %v994 = vpop.xlane.xlu0 %993
        %v995 = vsel %vm961, %v518, 0.0
        %996 = vadd.xlane.f32.xlu0 %v995
        %v997 = vpop.xlane.xlu0 %996
        %v998 = vsel %vm961, %v509, 0.0
        %999 = vadd.xlane.f32.xlu0 %v998
        %v1000 = vpop.xlane.xlu0 %999
        %v1001 = vsel %vm961, %v519, 0.0
        %1002 = vadd.xlane.f32.xlu0 %v1001
        %v1003 = vpop.xlane.xlu0 %1002
        %v1004 = vsel %vm961, %v516, 0.0
        %1005 = vadd.xlane.f32.xlu0 %v1004
        %v1006 = vpop.xlane.xlu0 %1005
        %v1007 = vsel %vm961, %v520, 0.0
        %1008 = vadd.xlane.f32.xlu0 %v1007
        %v1009 = vpop.xlane.xlu0 %1008
        %v1010 = vsel %vm961, %v561, 0.0
        %1011 = vadd.xlane.f32.xlu0 %v1010
        %v1012 = vpop.xlane.xlu0 %1011
        %v1013 = vsel %vm961, %v585, 0.0
        %1014 = vadd.xlane.f32.xlu0 %v1013
        %v1015 = vpop.xlane.xlu0 %1014
        %v1016 = vsel %vm961, %v568, 0.0
        %1017 = vadd.xlane.f32.xlu0 %v1016
        %v1018 = vpop.xlane.xlu0 %1017
        %v1019 = vsel %vm961, %v586, 0.0
        %1020 = vadd.xlane.f32.xlu0 %v1019
        %v1021 = vpop.xlane.xlu0 %1020
        %v1022 = vsel %vm961, %v577, 0.0
        %1023 = vadd.xlane.f32.xlu0 %v1022
        %v1024 = vpop.xlane.xlu0 %1023
        %v1025 = vsel %vm961, %v587, 0.0
        %1026 = vadd.xlane.f32.xlu0 %v1025
        %v1027 = vpop.xlane.xlu0 %1026
        %v1028 = vsel %vm961, %v584, 0.0
        %1029 = vadd.xlane.f32.xlu0 %v1028
        %v1030 = vpop.xlane.xlu0 %1029
        %v1031 = vsel %vm961, %v588, 0.0
        %1032 = vadd.xlane.f32.xlu0 %v1031
        %v1033 = vpop.xlane.xlu0 %1032
        %v1034 = vsel %vm961, %v629, 0.0
        %1035 = vadd.xlane.f32.xlu0 %v1034
        %v1036 = vpop.xlane.xlu0 %1035
        %v1037 = vsel %vm961, %v653, 0.0
        %1038 = vadd.xlane.f32.xlu0 %v1037
        %v1039 = vpop.xlane.xlu0 %1038
        %v1040 = vsel %vm961, %v636, 0.0
        %1041 = vadd.xlane.f32.xlu0 %v1040
        %v1042 = vpop.xlane.xlu0 %1041
        %v1043 = vsel %vm961, %v654, 0.0
        %1044 = vadd.xlane.f32.xlu0 %v1043
        %v1045 = vpop.xlane.xlu0 %1044
        %v1046 = vsel %vm961, %v645, 0.0
        %1047 = vadd.xlane.f32.xlu0 %v1046
        %v1048 = vpop.xlane.xlu0 %1047
        %v1049 = vsel %vm961, %v655, 0.0
        %1050 = vadd.xlane.f32.xlu0 %v1049
        %v1051 = vpop.xlane.xlu0 %1050
        %v1052 = vsel %vm961, %v652, 0.0
        %1053 = vadd.xlane.f32.xlu0 %v1052
        %v1054 = vpop.xlane.xlu0 %1053
        %v1055 = vsel %vm961, %v656, 0.0
        %1056 = vadd.xlane.f32.xlu0 %v1055
        %v1057 = vpop.xlane.xlu0 %1056
        %v1058 = vmul.f32 %v964, 0.015625
        %v1059 = vmul.f32 %v967, 0.015625
        %v1060 = vmul.f32 %v970, 0.015625
        %v1061 = vmul.f32 %v973, 0.015625
        %v1062 = vmul.f32 %v976, 0.015625
        %v1063 = vmul.f32 %v979, 0.015625
        %v1064 = vmul.f32 %v982, 0.015625
        %v1065 = vmul.f32 %v985, 0.015625
        %v1066 = vmul.f32 %v988, 0.015625
        %v1067 = vmul.f32 %v991, 0.015625
        %v1068 = vmul.f32 %v994, 0.015625
        %v1069 = vmul.f32 %v997, 0.015625
        %v1070 = vmul.f32 %v1000, 0.015625
        %v1071 = vmul.f32 %v1003, 0.015625
        %v1072 = vmul.f32 %v1006, 0.015625
        %v1073 = vmul.f32 %v1009, 0.015625
        %v1074 = vmul.f32 %v1012, 0.015625
        %v1075 = vmul.f32 %v1015, 0.015625
        %v1076 = vmul.f32 %v1018, 0.015625
        %v1077 = vmul.f32 %v1021, 0.015625
        %v1078 = vmul.f32 %v1024, 0.015625
        %v1079 = vmul.f32 %v1027, 0.015625
        %v1080 = vmul.f32 %v1030, 0.015625
        %v1081 = vmul.f32 %v1033, 0.015625
        %v1082 = vmul.f32 %v1036, 0.015625
        %v1083 = vmul.f32 %v1039, 0.015625
        %v1084 = vmul.f32 %v1042, 0.015625
        %v1085 = vmul.f32 %v1045, 0.015625
        %v1086 = vmul.f32 %v1048, 0.015625
        %v1087 = vmul.f32 %v1051, 0.015625
        %v1088 = vmul.f32 %v1054, 0.015625
        %v1089 = vmul.f32 %v1057, 0.015625
        %v1090 = vsel %vm961, %v729, 0.0
        %1091 = vadd.xlane.f32.xlu0 %v1090
        %v1092 = vpop.xlane.xlu0 %1091
        %v1093 = vsel %vm961, %v753, 0.0
        %1094 = vadd.xlane.f32.xlu0 %v1093
        %v1095 = vpop.xlane.xlu0 %1094
        %v1096 = vsel %vm961, %v736, 0.0
        %1097 = vadd.xlane.f32.xlu0 %v1096
        %v1098 = vpop.xlane.xlu0 %1097
        %v1099 = vsel %vm961, %v754, 0.0
        %1100 = vadd.xlane.f32.xlu0 %v1099
        %v1101 = vpop.xlane.xlu0 %1100
        %v1102 = vsel %vm961, %v745, 0.0
        %1103 = vadd.xlane.f32.xlu0 %v1102
        %v1104 = vpop.xlane.xlu0 %1103
        %v1105 = vsel %vm961, %v755, 0.0
        %1106 = vadd.xlane.f32.xlu0 %v1105
        %v1107 = vpop.xlane.xlu0 %1106
        %v1108 = vsel %vm961, %v752, 0.0
        %1109 = vadd.xlane.f32.xlu0 %v1108
        %v1110 = vpop.xlane.xlu0 %1109
        %v1111 = vsel %vm961, %v756, 0.0
        %1112 = vadd.xlane.f32.xlu0 %v1111
        %v1113 = vpop.xlane.xlu0 %1112
        %v1114 = vsel %vm961, %v797, 0.0
        %1115 = vadd.xlane.f32.xlu0 %v1114
        %v1116 = vpop.xlane.xlu0 %1115
        %v1117 = vsel %vm961, %v821, 0.0
        %1118 = vadd.xlane.f32.xlu0 %v1117
        %v1119 = vpop.xlane.xlu0 %1118
        %v1120 = vsel %vm961, %v804, 0.0
        %1121 = vadd.xlane.f32.xlu0 %v1120
        %v1122 = vpop.xlane.xlu0 %1121
        %v1123 = vsel %vm961, %v822, 0.0
        %1124 = vadd.xlane.f32.xlu0 %v1123
        %v1125 = vpop.xlane.xlu0 %1124
        %v1126 = vsel %vm961, %v813, 0.0
        %1127 = vadd.xlane.f32.xlu0 %v1126
        %v1128 = vpop.xlane.xlu0 %1127
        %v1129 = vsel %vm961, %v823, 0.0
        %1130 = vadd.xlane.f32.xlu0 %v1129
        %v1131 = vpop.xlane.xlu0 %1130
        %v1132 = vsel %vm961, %v820, 0.0
        %1133 = vadd.xlane.f32.xlu0 %v1132
        %v1134 = vpop.xlane.xlu0 %1133
        %v1135 = vsel %vm961, %v824, 0.0
        %1136 = vadd.xlane.f32.xlu0 %v1135
        %v1137 = vpop.xlane.xlu0 %1136
        %v1138 = vsel %vm961, %v865, 0.0
        %1139 = vadd.xlane.f32.xlu0 %v1138
        %v1140 = vpop.xlane.xlu0 %1139
        %v1141 = vsel %vm961, %v889, 0.0
        %1142 = vadd.xlane.f32.xlu0 %v1141
        %v1143 = vpop.xlane.xlu0 %1142
        %v1144 = vsel %vm961, %v872, 0.0
        %1145 = vadd.xlane.f32.xlu0 %v1144
        %v1146 = vpop.xlane.xlu0 %1145
        %v1147 = vsel %vm961, %v890, 0.0
        %1148 = vadd.xlane.f32.xlu0 %v1147
        %v1149 = vpop.xlane.xlu0 %1148
        %v1150 = vsel %vm961, %v881, 0.0
        %1151 = vadd.xlane.f32.xlu0 %v1150
        %v1152 = vpop.xlane.xlu0 %1151
        %v1153 = vsel %vm961, %v891, 0.0
        %1154 = vadd.xlane.f32.xlu0 %v1153
        %v1155 = vpop.xlane.xlu0 %1154
        %v1156 = vsel %vm961, %v888, 0.0
        %1157 = vadd.xlane.f32.xlu0 %v1156
        %v1158 = vpop.xlane.xlu0 %1157
        %v1159 = vsel %vm961, %v892, 0.0
        %1160 = vadd.xlane.f32.xlu0 %v1159
        %v1161 = vpop.xlane.xlu0 %1160
        %v1162 = vsel %vm961, %v933, 0.0
        %1163 = vadd.xlane.f32.xlu0 %v1162
        %v1164 = vpop.xlane.xlu0 %1163
        %v1165 = vsel %vm961, %v957, 0.0
        %1166 = vadd.xlane.f32.xlu0 %v1165
        %v1167 = vpop.xlane.xlu0 %1166
        %v1168 = vsel %vm961, %v940, 0.0
        %1169 = vadd.xlane.f32.xlu0 %v1168
        %v1170 = vpop.xlane.xlu0 %1169
        %v1171 = vsel %vm961, %v958, 0.0
        %1172 = vadd.xlane.f32.xlu0 %v1171
        %v1173 = vpop.xlane.xlu0 %1172
        %v1174 = vsel %vm961, %v949, 0.0
        %1175 = vadd.xlane.f32.xlu0 %v1174
        %v1176 = vpop.xlane.xlu0 %1175
        %v1177 = vsel %vm961, %v959, 0.0
        %1178 = vadd.xlane.f32.xlu0 %v1177
        %v1179 = vpop.xlane.xlu0 %1178
        %v1180 = vsel %vm961, %v956, 0.0
        %1181 = vadd.xlane.f32.xlu0 %v1180
        %v1182 = vpop.xlane.xlu0 %1181
        %v1183 = vsel %vm961, %v960, 0.0
        %1184 = vadd.xlane.f32.xlu0 %v1183
        %v1185 = vpop.xlane.xlu0 %1184
        %v1186 = vmul.f32 %v1092, 0.015625
        %v1187 = vmul.f32 %v1095, 0.015625
        %v1188 = vmul.f32 %v1098, 0.015625
        %v1189 = vmul.f32 %v1101, 0.015625
        %v1190 = vmul.f32 %v1104, 0.015625
        %v1191 = vmul.f32 %v1107, 0.015625
        %v1192 = vmul.f32 %v1110, 0.015625
        %v1193 = vmul.f32 %v1113, 0.015625
        %v1194 = vmul.f32 %v1116, 0.015625
        %v1195 = vmul.f32 %v1119, 0.015625
        %v1196 = vmul.f32 %v1122, 0.015625
        %v1197 = vmul.f32 %v1125, 0.015625
        %v1198 = vmul.f32 %v1128, 0.015625
        %v1199 = vmul.f32 %v1131, 0.015625
        %v1200 = vmul.f32 %v1134, 0.015625
        %v1201 = vmul.f32 %v1137, 0.015625
        %v1202 = vmul.f32 %v1140, 0.015625
        %v1203 = vmul.f32 %v1143, 0.015625
        %v1204 = vmul.f32 %v1146, 0.015625
        %v1205 = vmul.f32 %v1149, 0.015625
        %v1206 = vmul.f32 %v1152, 0.015625
        %v1207 = vmul.f32 %v1155, 0.015625
        %v1208 = vmul.f32 %v1158, 0.015625
        %v1209 = vmul.f32 %v1161, 0.015625
        %v1210 = vmul.f32 %v1164, 0.015625
        %v1211 = vmul.f32 %v1167, 0.015625
        %v1212 = vmul.f32 %v1170, 0.015625
        %v1213 = vmul.f32 %v1173, 0.015625
        %v1214 = vmul.f32 %v1176, 0.015625
        %v1215 = vmul.f32 %v1179, 0.015625
        %v1216 = vmul.f32 %v1182, 0.015625
        %v1217 = vmul.f32 %v1185, 0.015625
        %v1218 = vld [vmem:[%s2] sm:$0x3]
        %v1219 = vld [vmem:[%s3] sm:$0x3]
        %v1252 = vlaneseq
        %v1253 = vand.u32 %v1252, 127
        %v1254 = vlaneseq
        %v1255 = vshrl.u32 %v1254, 7
        %v1256 = vsub.s32 %v1253, %v1255
        %v1257 = vrot.slane %v1186, %v1256
        %v1258 = vlaneseq
        %v1259 = vshrl.u32 %v1258, 7
        %v1260 = vsub.s32 %v1253, %v1259
        %v1261 = vrot.slane %v1187, %v1260
        %v1262 = vlaneseq
        %v1263 = vshrl.u32 %v1262, 7
        %v1264 = vsub.s32 %v1253, %v1263
        %v1265 = vrot.slane %v1188, %v1264
        %v1266 = vlaneseq
        %v1267 = vshrl.u32 %v1266, 7
        %v1268 = vsub.s32 %v1253, %v1267
        %v1269 = vrot.slane %v1189, %v1268
        %v1270 = vlaneseq
        %v1271 = vshrl.u32 %v1270, 7
        %v1272 = vsub.s32 %v1253, %v1271
        %v1273 = vrot.slane %v1190, %v1272
        %v1274 = vlaneseq
        %v1275 = vshrl.u32 %v1274, 7
        %v1276 = vsub.s32 %v1253, %v1275
        %v1277 = vrot.slane %v1191, %v1276
        %v1278 = vlaneseq
        %v1279 = vshrl.u32 %v1278, 7
        %v1280 = vsub.s32 %v1253, %v1279
        %v1281 = vrot.slane %v1192, %v1280
        %v1282 = vlaneseq
        %v1283 = vshrl.u32 %v1282, 7
        %v1284 = vsub.s32 %v1253, %v1283
        %v1285 = vrot.slane %v1193, %v1284
        %v1286 = vlaneseq
        %v1287 = vshrl.u32 %v1286, 7
        %v1288 = vsub.s32 %v1253, %v1287
        %v1289 = vrot.slane %v1194, %v1288
        %v1290 = vlaneseq
        %v1291 = vshrl.u32 %v1290, 7
        %v1292 = vsub.s32 %v1253, %v1291
        %v1293 = vrot.slane %v1195, %v1292
        %v1294 = vlaneseq
        %v1295 = vshrl.u32 %v1294, 7
        %v1296 = vsub.s32 %v1253, %v1295
        %v1297 = vrot.slane %v1196, %v1296
        %v1298 = vlaneseq
        %v1299 = vshrl.u32 %v1298, 7
        %v1300 = vsub.s32 %v1253, %v1299
        %v1301 = vrot.slane %v1197, %v1300
        %v1302 = vlaneseq
        %v1303 = vshrl.u32 %v1302, 7
        %v1304 = vsub.s32 %v1253, %v1303
        %v1305 = vrot.slane %v1198, %v1304
        %v1306 = vlaneseq
        %v1307 = vshrl.u32 %v1306, 7
        %v1308 = vsub.s32 %v1253, %v1307
        %v1309 = vrot.slane %v1199, %v1308
        %v1310 = vlaneseq
        %v1311 = vshrl.u32 %v1310, 7
        %v1312 = vsub.s32 %v1253, %v1311
        %v1313 = vrot.slane %v1200, %v1312
        %v1314 = vlaneseq
        %v1315 = vshrl.u32 %v1314, 7
        %v1316 = vsub.s32 %v1253, %v1315
        %v1317 = vrot.slane %v1201, %v1316
        %v1318 = vlaneseq
        %v1319 = vshrl.u32 %v1318, 7
        %v1320 = vsub.s32 %v1253, %v1319
        %v1321 = vrot.slane %v1202, %v1320
        %v1322 = vlaneseq
        %v1323 = vshrl.u32 %v1322, 7
        %v1324 = vsub.s32 %v1253, %v1323
        %v1325 = vrot.slane %v1203, %v1324
        %v1326 = vlaneseq
        %v1327 = vshrl.u32 %v1326, 7
        %v1328 = vsub.s32 %v1253, %v1327
        %v1329 = vrot.slane %v1204, %v1328
        %v1330 = vlaneseq
        %v1331 = vshrl.u32 %v1330, 7
        %v1332 = vsub.s32 %v1253, %v1331
        %v1333 = vrot.slane %v1205, %v1332
        %v1334 = vlaneseq
        %v1335 = vshrl.u32 %v1334, 7
        %v1336 = vsub.s32 %v1253, %v1335
        %v1337 = vrot.slane %v1206, %v1336
        %v1338 = vlaneseq
        %v1339 = vshrl.u32 %v1338, 7
        %v1340 = vsub.s32 %v1253, %v1339
        %v1341 = vrot.slane %v1207, %v1340
        %v1342 = vlaneseq
        %v1343 = vshrl.u32 %v1342, 7
        %v1344 = vsub.s32 %v1253, %v1343
        %v1345 = vrot.slane %v1208, %v1344
        %v1346 = vlaneseq
        %v1347 = vshrl.u32 %v1346, 7
        %v1348 = vsub.s32 %v1253, %v1347
        %v1349 = vrot.slane %v1209, %v1348
        %v1350 = vlaneseq
        %v1351 = vshrl.u32 %v1350, 7
        %v1352 = vsub.s32 %v1253, %v1351
        %v1353 = vrot.slane %v1210, %v1352
        %v1354 = vlaneseq
        %v1355 = vshrl.u32 %v1354, 7
        %v1356 = vsub.s32 %v1253, %v1355
        %v1357 = vrot.slane %v1211, %v1356
        %v1358 = vlaneseq
        %v1359 = vshrl.u32 %v1358, 7
        %v1360 = vsub.s32 %v1253, %v1359
        %v1361 = vrot.slane %v1212, %v1360
        %v1362 = vlaneseq
        %v1363 = vshrl.u32 %v1362, 7
        %v1364 = vsub.s32 %v1253, %v1363
        %v1365 = vrot.slane %v1213, %v1364
        %v1366 = vlaneseq
        %v1367 = vshrl.u32 %v1366, 7
        %v1368 = vsub.s32 %v1253, %v1367
        %v1369 = vrot.slane %v1214, %v1368
        %v1370 = vlaneseq
        %v1371 = vshrl.u32 %v1370, 7
        %v1372 = vsub.s32 %v1253, %v1371
        %v1373 = vrot.slane %v1215, %v1372
        %v1374 = vlaneseq
        %v1375 = vshrl.u32 %v1374, 7
        %v1376 = vsub.s32 %v1253, %v1375
        %v1377 = vrot.slane %v1216, %v1376
        %v1378 = vlaneseq
        %v1379 = vshrl.u32 %v1378, 7
        %v1380 = vsub.s32 %v1253, %v1379
        %v1381 = vrot.slane %v1217, %v1380
        %vm1382 = vcmask 1041409
        %v1383 = vsel %vm1382, %v1261, %v1257
        %vm1384 = vcmask 1042434
        %v1385 = vsel %vm1384, %v1265, %v1383
        %vm1386 = vcmask 1043459
        %v1387 = vsel %vm1386, %v1269, %v1385
        %vm1388 = vcmask 1044484
        %v1389 = vsel %vm1388, %v1273, %v1387
        %vm1390 = vcmask 1045509
        %v1391 = vsel %vm1390, %v1277, %v1389
        %vm1392 = vcmask 1046534
        %v1393 = vsel %vm1392, %v1281, %v1391
        %vm1394 = vcmask 1047559
        %v1395 = vsel %vm1394, %v1285, %v1393
        %v1396 = vsel %vm1382, %v1293, %v1289
        %v1397 = vsel %vm1384, %v1297, %v1396
        %v1398 = vsel %vm1386, %v1301, %v1397
        %v1399 = vsel %vm1388, %v1305, %v1398
        %v1400 = vsel %vm1390, %v1309, %v1399
        %v1401 = vsel %vm1392, %v1313, %v1400
        %v1402 = vsel %vm1394, %v1317, %v1401
        %v1403 = vsel %vm1382, %v1325, %v1321
        %v1404 = vsel %vm1384, %v1329, %v1403
        %v1405 = vsel %vm1386, %v1333, %v1404
        %v1406 = vsel %vm1388, %v1337, %v1405
        %v1407 = vsel %vm1390, %v1341, %v1406
        %v1408 = vsel %vm1392, %v1345, %v1407
        %v1409 = vsel %vm1394, %v1349, %v1408
        %v1410 = vsel %vm1382, %v1357, %v1353
        %v1411 = vsel %vm1384, %v1361, %v1410
        %v1412 = vsel %vm1386, %v1365, %v1411
        %v1413 = vsel %vm1388, %v1369, %v1412
        %v1414 = vsel %vm1390, %v1373, %v1413
        %v1415 = vsel %vm1392, %v1377, %v1414
        %v1416 = vsel %vm1394, %v1381, %v1415
        %vm1421 = vcmask 261120
        %v1423 = vsel %vm1421, %v1219, 0
        %1425 = vmatprep.subr.mxu0 0.0
        %1426 = vmatpush1.msra.mxu0 %v1395
        %1427 = vmatprep.subr.mxu0 0.0
        %1428 = vmatpush1.msra.mxu0 %v1402
        %1429 = vmatprep.subr.mxu0 0.0
        %1430 = vmatpush1.msra.mxu0 %v1409
        %1431 = vmatprep.subr.mxu0 0.0
        %1432 = vmatpush1.msra.mxu0 %v1416
        %1433 = vmatprep.subr.mxu0 0.0
        %1434 = vmatpush1.msra.mxu0 0.0
        %1435 = vmatprep.subr.mxu0 0.0
        %1436 = vmatpush1.msra.mxu0 0.0
        %1437 = vmatprep.subr.mxu0 0.0
        %1438 = vmatpush1.msra.mxu0 0.0
        %1439 = vmatprep.subr.mxu0 0.0
        %1440 = vmatpush1.msra.mxu0 0.0
        %1441 = vmatprep.subr.mxu0 0.0
        %1442 = vmatpush1.msra.mxu0 0.0
        %1443 = vmatprep.subr.mxu0 0.0
        %1444 = vmatpush1.msra.mxu0 0.0
        %1445 = vmatprep.subr.mxu0 0.0
        %1446 = vmatpush1.msra.mxu0 0.0
        %1447 = vmatprep.subr.mxu0 0.0
        %1448 = vmatpush1.msra.mxu0 0.0
        %1449 = vmatprep.subr.mxu0 0.0
        %1450 = vmatpush1.msra.mxu0 0.0
        %1451 = vmatprep.subr.mxu0 0.0
        %1452 = vmatpush1.msra.mxu0 0.0
        %1453 = vmatprep.subr.mxu0 0.0
        %1454 = vmatpush1.msra.mxu0 0.0
        %1455 = vmatprep.subr.mxu0 0.0
        %1456 = vmatpush1.msra.mxu0 0.0
        %1457 = vmatprep.subr.mxu0 0.0
        %1458 = vmatpush1.msra.mxu0 0.0
        %1459 = vmatprep.subr.mxu0 0.0
        %1460 = vmatpush1.msra.mxu0 0.0
        %1461 = vmatprep.subr.mxu0 0.0
        %1462 = vmatpush1.msra.mxu0 0.0
        %1463 = vmatprep.subr.mxu0 0.0
        %1464 = vmatpush1.msra.mxu0 0.0
        %1465 = vmatprep.subr.mxu0 0.0
        %1466 = vmatpush1.msra.mxu0 0.0
        %1467 = vmatprep.subr.mxu0 0.0
        %1468 = vmatpush1.msra.mxu0 0.0
        %1469 = vmatprep.subr.mxu0 0.0
        %1470 = vmatpush1.msra.mxu0 0.0
        %1471 = vmatprep.subr.mxu0 0.0
        %1472 = vmatpush1.msra.mxu0 0.0
        %1473 = vmatprep.subr.mxu0 0.0
        %1474 = vmatpush1.msra.mxu0 0.0
        %1475 = vmatprep.subr.mxu0 0.0
        %1476 = vmatpush1.msra.mxu0 0.0
        %1477 = vmatprep.subr.mxu0 0.0
        %1478 = vmatpush1.msra.mxu0 0.0
        %1479 = vmatprep.subr.mxu0 0.0
        %1480 = vmatpush1.msra.mxu0 0.0
        %1481 = vmatprep.subr.mxu0 0.0
        %1482 = vmatpush1.msra.mxu0 0.0
        %1483 = vmatprep.subr.mxu0 0.0
        %1484 = vmatpush1.msra.mxu0 0.0
        %1485 = vmatprep.subr.mxu0 0.0
        %1486 = vmatpush1.msra.mxu0 0.0
        %1487 = vmatprep.subr.mxu0 0.0
        %1488 = vmatpush1.msra.mxu0 0.0
        %1489 = vmatprep.mubr.f32.mxu0 0.0
        %1490 = vmatmul.mubr.f32.gmra.mrb[0].mxu0 %v1423
        %v1491 = vpop.f32.mrb[0].mxu0
        %v1492 = vadd.f32 0.0, %v1491
        %v1493 = vpop.f32.mrb[0].mxu0
        %1494 = vdwg.mxu0
        %v1527 = vlaneseq
        %v1528 = vshrl.u32 %v1527, 7
        %v1529 = vsub.s32 %v1253, %v1528
        %v1530 = vrot.slane %v1058, %v1529
        %v1531 = vlaneseq
        %v1532 = vshrl.u32 %v1531, 7
        %v1533 = vsub.s32 %v1253, %v1532
        %v1534 = vrot.slane %v1059, %v1533
        %v1535 = vlaneseq
        %v1536 = vshrl.u32 %v1535, 7
        %v1537 = vsub.s32 %v1253, %v1536
        %v1538 = vrot.slane %v1060, %v1537
        %v1539 = vlaneseq
        %v1540 = vshrl.u32 %v1539, 7
        %v1541 = vsub.s32 %v1253, %v1540
        %v1542 = vrot.slane %v1061, %v1541
        %v1543 = vlaneseq
        %v1544 = vshrl.u32 %v1543, 7
        %v1545 = vsub.s32 %v1253, %v1544
        %v1546 = vrot.slane %v1062, %v1545
        %v1547 = vlaneseq
        %v1548 = vshrl.u32 %v1547, 7
        %v1549 = vsub.s32 %v1253, %v1548
        %v1550 = vrot.slane %v1063, %v1549
        %v1551 = vlaneseq
        %v1552 = vshrl.u32 %v1551, 7
        %v1553 = vsub.s32 %v1253, %v1552
        %v1554 = vrot.slane %v1064, %v1553
        %v1555 = vlaneseq
        %v1556 = vshrl.u32 %v1555, 7
        %v1557 = vsub.s32 %v1253, %v1556
        %v1558 = vrot.slane %v1065, %v1557
        %v1559 = vlaneseq
        %v1560 = vshrl.u32 %v1559, 7
        %v1561 = vsub.s32 %v1253, %v1560
        %v1562 = vrot.slane %v1066, %v1561
        %v1563 = vlaneseq
        %v1564 = vshrl.u32 %v1563, 7
        %v1565 = vsub.s32 %v1253, %v1564
        %v1566 = vrot.slane %v1067, %v1565
        %v1567 = vlaneseq
        %v1568 = vshrl.u32 %v1567, 7
        %v1569 = vsub.s32 %v1253, %v1568
        %v1570 = vrot.slane %v1068, %v1569
        %v1571 = vlaneseq
        %v1572 = vshrl.u32 %v1571, 7
        %v1573 = vsub.s32 %v1253, %v1572
        %v1574 = vrot.slane %v1069, %v1573
        %v1575 = vlaneseq
        %v1576 = vshrl.u32 %v1575, 7
        %v1577 = vsub.s32 %v1253, %v1576
        %v1578 = vrot.slane %v1070, %v1577
        %v1579 = vlaneseq
        %v1580 = vshrl.u32 %v1579, 7
        %v1581 = vsub.s32 %v1253, %v1580
        %v1582 = vrot.slane %v1071, %v1581
        %v1583 = vlaneseq
        %v1584 = vshrl.u32 %v1583, 7
        %v1585 = vsub.s32 %v1253, %v1584
        %v1586 = vrot.slane %v1072, %v1585
        %v1587 = vlaneseq
        %v1588 = vshrl.u32 %v1587, 7
        %v1589 = vsub.s32 %v1253, %v1588
        %v1590 = vrot.slane %v1073, %v1589
        %v1591 = vlaneseq
        %v1592 = vshrl.u32 %v1591, 7
        %v1593 = vsub.s32 %v1253, %v1592
        %v1594 = vrot.slane %v1074, %v1593
        %v1595 = vlaneseq
        %v1596 = vshrl.u32 %v1595, 7
        %v1597 = vsub.s32 %v1253, %v1596
        %v1598 = vrot.slane %v1075, %v1597
        %v1599 = vlaneseq
        %v1600 = vshrl.u32 %v1599, 7
        %v1601 = vsub.s32 %v1253, %v1600
        %v1602 = vrot.slane %v1076, %v1601
        %v1603 = vlaneseq
        %v1604 = vshrl.u32 %v1603, 7
        %v1605 = vsub.s32 %v1253, %v1604
        %v1606 = vrot.slane %v1077, %v1605
        %v1607 = vlaneseq
        %v1608 = vshrl.u32 %v1607, 7
        %v1609 = vsub.s32 %v1253, %v1608
        %v1610 = vrot.slane %v1078, %v1609
        %v1611 = vlaneseq
        %v1612 = vshrl.u32 %v1611, 7
        %v1613 = vsub.s32 %v1253, %v1612
        %v1614 = vrot.slane %v1079, %v1613
        %v1615 = vlaneseq
        %v1616 = vshrl.u32 %v1615, 7
        %v1617 = vsub.s32 %v1253, %v1616
        %v1618 = vrot.slane %v1080, %v1617
        %v1619 = vlaneseq
        %v1620 = vshrl.u32 %v1619, 7
        %v1621 = vsub.s32 %v1253, %v1620
        %v1622 = vrot.slane %v1081, %v1621
        %v1623 = vlaneseq
        %v1624 = vshrl.u32 %v1623, 7
        %v1625 = vsub.s32 %v1253, %v1624
        %v1626 = vrot.slane %v1082, %v1625
        %v1627 = vlaneseq
        %v1628 = vshrl.u32 %v1627, 7
        %v1629 = vsub.s32 %v1253, %v1628
        %v1630 = vrot.slane %v1083, %v1629
        %v1631 = vlaneseq
        %v1632 = vshrl.u32 %v1631, 7
        %v1633 = vsub.s32 %v1253, %v1632
        %v1634 = vrot.slane %v1084, %v1633
        %v1635 = vlaneseq
        %v1636 = vshrl.u32 %v1635, 7
        %v1637 = vsub.s32 %v1253, %v1636
        %v1638 = vrot.slane %v1085, %v1637
        %v1639 = vlaneseq
        %v1640 = vshrl.u32 %v1639, 7
        %v1641 = vsub.s32 %v1253, %v1640
        %v1642 = vrot.slane %v1086, %v1641
        %v1643 = vlaneseq
        %v1644 = vshrl.u32 %v1643, 7
        %v1645 = vsub.s32 %v1253, %v1644
        %v1646 = vrot.slane %v1087, %v1645
        %v1647 = vlaneseq
        %v1648 = vshrl.u32 %v1647, 7
        %v1649 = vsub.s32 %v1253, %v1648
        %v1650 = vrot.slane %v1088, %v1649
        %v1651 = vlaneseq
        %v1652 = vshrl.u32 %v1651, 7
        %v1653 = vsub.s32 %v1253, %v1652
        %v1654 = vrot.slane %v1089, %v1653
        %v1655 = vsel %vm1382, %v1534, %v1530
        %v1656 = vsel %vm1384, %v1538, %v1655
        %v1657 = vsel %vm1386, %v1542, %v1656
        %v1658 = vsel %vm1388, %v1546, %v1657
        %v1659 = vsel %vm1390, %v1550, %v1658
        %v1660 = vsel %vm1392, %v1554, %v1659
        %v1661 = vsel %vm1394, %v1558, %v1660
        %v1662 = vsel %vm1382, %v1566, %v1562
        %v1663 = vsel %vm1384, %v1570, %v1662
        %v1664 = vsel %vm1386, %v1574, %v1663
        %v1665 = vsel %vm1388, %v1578, %v1664
        %v1666 = vsel %vm1390, %v1582, %v1665
        %v1667 = vsel %vm1392, %v1586, %v1666
        %v1668 = vsel %vm1394, %v1590, %v1667
        %v1669 = vsel %vm1382, %v1598, %v1594
        %v1670 = vsel %vm1384, %v1602, %v1669
        %v1671 = vsel %vm1386, %v1606, %v1670
        %v1672 = vsel %vm1388, %v1610, %v1671
        %v1673 = vsel %vm1390, %v1614, %v1672
        %v1674 = vsel %vm1392, %v1618, %v1673
        %v1675 = vsel %vm1394, %v1622, %v1674
        %v1676 = vsel %vm1382, %v1630, %v1626
        %v1677 = vsel %vm1384, %v1634, %v1676
        %v1678 = vsel %vm1386, %v1638, %v1677
        %v1679 = vsel %vm1388, %v1642, %v1678
        %v1680 = vsel %vm1390, %v1646, %v1679
        %v1681 = vsel %vm1392, %v1650, %v1680
        %v1682 = vsel %vm1394, %v1654, %v1681
        %v1688 = vsel %vm1421, %v1218, 0
        %1690 = vmatprep.subr.mxu0 0.0
        %1691 = vmatpush1.msra.mxu0 %v1661
        %1692 = vmatprep.subr.mxu0 0.0
        %1693 = vmatpush1.msra.mxu0 %v1668
        %1694 = vmatprep.subr.mxu0 0.0
        %1695 = vmatpush1.msra.mxu0 %v1675
        %1696 = vmatprep.subr.mxu0 0.0
        %1697 = vmatpush1.msra.mxu0 %v1682
        %1698 = vmatprep.subr.mxu0 0.0
        %1699 = vmatpush1.msra.mxu0 0.0
        %1700 = vmatprep.subr.mxu0 0.0
        %1701 = vmatpush1.msra.mxu0 0.0
        %1702 = vmatprep.subr.mxu0 0.0
        %1703 = vmatpush1.msra.mxu0 0.0
        %1704 = vmatprep.subr.mxu0 0.0
        %1705 = vmatpush1.msra.mxu0 0.0
        %1706 = vmatprep.subr.mxu0 0.0
        %1707 = vmatpush1.msra.mxu0 0.0
        %1708 = vmatprep.subr.mxu0 0.0
        %1709 = vmatpush1.msra.mxu0 0.0
        %1710 = vmatprep.subr.mxu0 0.0
        %1711 = vmatpush1.msra.mxu0 0.0
        %1712 = vmatprep.subr.mxu0 0.0
        %1713 = vmatpush1.msra.mxu0 0.0
        %1714 = vmatprep.subr.mxu0 0.0
        %1715 = vmatpush1.msra.mxu0 0.0
        %1716 = vmatprep.subr.mxu0 0.0
        %1717 = vmatpush1.msra.mxu0 0.0
        %1718 = vmatprep.subr.mxu0 0.0
        %1719 = vmatpush1.msra.mxu0 0.0
        %1720 = vmatprep.subr.mxu0 0.0
        %1721 = vmatpush1.msra.mxu0 0.0
        %1722 = vmatprep.subr.mxu0 0.0
        %1723 = vmatpush1.msra.mxu0 0.0
        %1724 = vmatprep.subr.mxu0 0.0
        %1725 = vmatpush1.msra.mxu0 0.0
        %1726 = vmatprep.subr.mxu0 0.0
        %1727 = vmatpush1.msra.mxu0 0.0
        %1728 = vmatprep.subr.mxu0 0.0
        %1729 = vmatpush1.msra.mxu0 0.0
        %1730 = vmatprep.subr.mxu0 0.0
        %1731 = vmatpush1.msra.mxu0 0.0
        %1732 = vmatprep.subr.mxu0 0.0
        %1733 = vmatpush1.msra.mxu0 0.0
        %1734 = vmatprep.subr.mxu0 0.0
        %1735 = vmatpush1.msra.mxu0 0.0
        %1736 = vmatprep.subr.mxu0 0.0
        %1737 = vmatpush1.msra.mxu0 0.0
        %1738 = vmatprep.subr.mxu0 0.0
        %1739 = vmatpush1.msra.mxu0 0.0
        %1740 = vmatprep.subr.mxu0 0.0
        %1741 = vmatpush1.msra.mxu0 0.0
        %1742 = vmatprep.subr.mxu0 0.0
        %1743 = vmatpush1.msra.mxu0 0.0
        %1744 = vmatprep.subr.mxu0 0.0
        %1745 = vmatpush1.msra.mxu0 0.0
        %1746 = vmatprep.subr.mxu0 0.0
        %1747 = vmatpush1.msra.mxu0 0.0
        %1748 = vmatprep.subr.mxu0 0.0
        %1749 = vmatpush1.msra.mxu0 0.0
        %1750 = vmatprep.subr.mxu0 0.0
        %1751 = vmatpush1.msra.mxu0 0.0
        %1752 = vmatprep.subr.mxu0 0.0
        %1753 = vmatpush1.msra.mxu0 0.0
        %1754 = vmatprep.mubr.f32.mxu0 0.0
        %1755 = vmatmul.mubr.f32.gmra.mrb[0].mxu0 %v1688
        %v1756 = vpop.f32.mrb[0].mxu0
        %v1757 = vadd.f32 %v1492, %v1756
        %v1758 = vpop.f32.mrb[0].mxu0
        %1759 = vdwg.mxu0
        %v1760 = vld [vmem:[%s4] sm:$0x3]
        %1762 = vset.pattern.permute.xlu0 0
        %1763 = vperm.xlu0 %1762, %v1760
        %v1764 = vpop.permute.xlu0 %1763
        %v1766 = vadd.f32 %v1757, %v1764
        %v1767 = vmax.f32 %v1766, 0.0
        %v1768 = vld [vmem:[%s5] sm:$0xff]
        %v1769 = vld [vmem:[%s5 + $0x8] sm:$0xff]
        %v1770 = vld [vmem:[%s5 + $0x10] sm:$0xff]
        %v1771 = vld [vmem:[%s5 + $0x18] sm:$0xff]
        %v1772 = vld [vmem:[%s6] sm:$0xff]
        %v1773 = vld [vmem:[%s6 + $0x8] sm:$0xff]
        %v1774 = vld [vmem:[%s6 + $0x10] sm:$0xff]
        %v1775 = vld [vmem:[%s6 + $0x18] sm:$0xff]
        %1777 = vset.pattern.permute.xlu0 0
        %1778 = vperm.xlu0 %1777, %v1772
        %v1779 = vpop.permute.xlu0 %1778
        %1782 = vset.pattern.permute.xlu0 0
        %1783 = vperm.xlu0 %1782, %v1773
        %v1784 = vpop.permute.xlu0 %1783
        %1787 = vset.pattern.permute.xlu0 0
        %1788 = vperm.xlu0 %1787, %v1774
        %v1789 = vpop.permute.xlu0 %1788
        %1792 = vset.pattern.permute.xlu0 0
        %1793 = vperm.xlu0 %1792, %v1775
        %v1794 = vpop.permute.xlu0 %1793
        %vm1796 = vcmask 15360
        %v1798 = vsel %vm1796, %v1768, 0
        %v1801 = vsel %vm1796, %v1769, 0
        %v1804 = vsel %vm1796, %v1770, 0
        %v1807 = vsel %vm1796, %v1771, 0
        %vm1809 = vcmask 1041408
        %v1811 = vsel %vm1809, %v1767, 0
        %1813 = vmatprep.subr.mxu0 0.0
        %1814 = vmatpush1.msra.mxu0 %v1811
        %1815 = vmatprep.subr.mxu0 0.0
        %1816 = vmatpush1.msra.mxu0 0.0
        %1817 = vmatprep.subr.mxu0 0.0
        %1818 = vmatpush1.msra.mxu0 0.0
        %1819 = vmatprep.subr.mxu0 0.0
        %1820 = vmatpush1.msra.mxu0 0.0
        %1821 = vmatprep.subr.mxu0 0.0
        %1822 = vmatpush1.msra.mxu0 0.0
        %1823 = vmatprep.subr.mxu0 0.0
        %1824 = vmatpush1.msra.mxu0 0.0
        %1825 = vmatprep.subr.mxu0 0.0
        %1826 = vmatpush1.msra.mxu0 0.0
        %1827 = vmatprep.subr.mxu0 0.0
        %1828 = vmatpush1.msra.mxu0 0.0
        %1829 = vmatprep.subr.mxu0 0.0
        %1830 = vmatpush1.msra.mxu0 0.0
        %1831 = vmatprep.subr.mxu0 0.0
        %1832 = vmatpush1.msra.mxu0 0.0
        %1833 = vmatprep.subr.mxu0 0.0
        %1834 = vmatpush1.msra.mxu0 0.0
        %1835 = vmatprep.subr.mxu0 0.0
        %1836 = vmatpush1.msra.mxu0 0.0
        %1837 = vmatprep.subr.mxu0 0.0
        %1838 = vmatpush1.msra.mxu0 0.0
        %1839 = vmatprep.subr.mxu0 0.0
        %1840 = vmatpush1.msra.mxu0 0.0
        %1841 = vmatprep.subr.mxu0 0.0
        %1842 = vmatpush1.msra.mxu0 0.0
        %1843 = vmatprep.subr.mxu0 0.0
        %1844 = vmatpush1.msra.mxu0 0.0
        %1845 = vmatprep.subr.mxu0 0.0
        %1846 = vmatpush1.msra.mxu0 0.0
        %1847 = vmatprep.subr.mxu0 0.0
        %1848 = vmatpush1.msra.mxu0 0.0
        %1849 = vmatprep.subr.mxu0 0.0
        %1850 = vmatpush1.msra.mxu0 0.0
        %1851 = vmatprep.subr.mxu0 0.0
        %1852 = vmatpush1.msra.mxu0 0.0
        %1853 = vmatprep.subr.mxu0 0.0
        %1854 = vmatpush1.msra.mxu0 0.0
        %1855 = vmatprep.subr.mxu0 0.0
        %1856 = vmatpush1.msra.mxu0 0.0
        %1857 = vmatprep.subr.mxu0 0.0
        %1858 = vmatpush1.msra.mxu0 0.0
        %1859 = vmatprep.subr.mxu0 0.0
        %1860 = vmatpush1.msra.mxu0 0.0
        %1861 = vmatprep.subr.mxu0 0.0
        %1862 = vmatpush1.msra.mxu0 0.0
        %1863 = vmatprep.subr.mxu0 0.0
        %1864 = vmatpush1.msra.mxu0 0.0
        %1865 = vmatprep.subr.mxu0 0.0
        %1866 = vmatpush1.msra.mxu0 0.0
        %1867 = vmatprep.subr.mxu0 0.0
        %1868 = vmatpush1.msra.mxu0 0.0
        %1869 = vmatprep.subr.mxu0 0.0
        %1870 = vmatpush1.msra.mxu0 0.0
        %1871 = vmatprep.subr.mxu0 0.0
        %1872 = vmatpush1.msra.mxu0 0.0
        %1873 = vmatprep.subr.mxu0 0.0
        %1874 = vmatpush1.msra.mxu0 0.0
        %1875 = vmatprep.subr.mxu0 0.0
        %1876 = vmatpush1.msra.mxu0 0.0
        %1877 = vmatprep.mubr.f32.mxu0 0.0
        %1878 = vmatmul.mubr.f32.gmra.mrb[0].mxu0 %v1798
        %v1879 = vpop.f32.mrb[0].mxu0
        %v1880 = vadd.f32 %v1779, %v1879
        %v1881 = vpop.f32.mrb[0].mxu0
        %1882 = vmatprep.mubr.f32.mxu0 0.0
        %1883 = vmatmul.mubr.f32.gmra.mrb[0].mxu0 %v1801
        %v1884 = vpop.f32.mrb[0].mxu0
        %v1885 = vadd.f32 %v1784, %v1884
        %v1886 = vpop.f32.mrb[0].mxu0
        %1887 = vmatprep.mubr.f32.mxu0 0.0
        %1888 = vmatmul.mubr.f32.gmra.mrb[0].mxu0 %v1804
        %v1889 = vpop.f32.mrb[0].mxu0
        %v1890 = vadd.f32 %v1789, %v1889
        %v1891 = vpop.f32.mrb[0].mxu0
        %1892 = vmatprep.mubr.f32.mxu0 0.0
        %1893 = vmatmul.mubr.f32.gmra.mrb[0].mxu0 %v1807
        %v1894 = vpop.f32.mrb[0].mxu0
        %v1895 = vadd.f32 %v1794, %v1894
        %v1896 = vpop.f32.mrb[0].mxu0
        %1897 = vdwg.mxu0
        %v1898 = vxor.u32 %v1880, 2147483648
        %v1899 = vxor.u32 %v1885, 2147483648
        %v1900 = vxor.u32 %v1890, 2147483648
        %v1901 = vxor.u32 %v1895, 2147483648
        %v1902 = vmul.f32 %v1898, 1.442695
        %v1903 = vpow.pop %v1902
        %v1904 = vmul.f32 %v1899, 1.442695
        %v1905 = vpow.pop %v1904
        %v1906 = vmul.f32 %v1900, 1.442695
        %v1907 = vpow.pop %v1906
        %v1908 = vmul.f32 %v1901, 1.442695
        %v1909 = vpow.pop %v1908
        %v1910 = vadd.f32 %v1903, 1.0
        %v1911 = vadd.f32 %v1905, 1.0
        %v1912 = vadd.f32 %v1907, 1.0
        %v1913 = vadd.f32 %v1909, 1.0
        %v1914 = vrcp.pop %v1910
        %v1915 = vmul.f32 1.0, %v1914
        %v1916 = vrcp.pop %v1911
        %v1917 = vmul.f32 1.0, %v1916
        %v1918 = vrcp.pop %v1912
        %v1919 = vmul.f32 1.0, %v1918
        %v1920 = vrcp.pop %v1913
        %v1921 = vmul.f32 1.0, %v1920
        %v1922 = vlaneseq
        %v1923 = vshrl.u32 %v1922, 7
        %v1924 = vsub.s32 0, %v1923
        %v1925 = vrot.slane %v1915, %v1924
        %1927 = vbcast.lane.b32.xlu0 %v1925, 256
        %v1928 = vpop.permute.xlu0 %1927
        %v1929 = vlaneseq
        %v1930 = vshrl.u32 %v1929, 7
        %v1931 = vsub.s32 1, %v1930
        %v1932 = vrot.slane %v1915, %v1931
        %1934 = vbcast.lane.b32.xlu0 %v1932, 256
        %v1935 = vpop.permute.xlu0 %1934
        %v1936 = vlaneseq
        %v1937 = vshrl.u32 %v1936, 7
        %v1938 = vsub.s32 2, %v1937
        %v1939 = vrot.slane %v1915, %v1938
        %1941 = vbcast.lane.b32.xlu0 %v1939, 256
        %v1942 = vpop.permute.xlu0 %1941
        %v1943 = vlaneseq
        %v1944 = vshrl.u32 %v1943, 7
        %v1945 = vsub.s32 3, %v1944
        %v1946 = vrot.slane %v1915, %v1945
        %1948 = vbcast.lane.b32.xlu0 %v1946, 256
        %v1949 = vpop.permute.xlu0 %1948
        %v1950 = vlaneseq
        %v1951 = vshrl.u32 %v1950, 7
        %v1952 = vsub.s32 4, %v1951
        %v1953 = vrot.slane %v1915, %v1952
        %1955 = vbcast.lane.b32.xlu0 %v1953, 256
        %v1956 = vpop.permute.xlu0 %1955
        %v1957 = vlaneseq
        %v1958 = vshrl.u32 %v1957, 7
        %v1959 = vsub.s32 5, %v1958
        %v1960 = vrot.slane %v1915, %v1959
        %1962 = vbcast.lane.b32.xlu0 %v1960, 256
        %v1963 = vpop.permute.xlu0 %1962
        %v1964 = vlaneseq
        %v1965 = vshrl.u32 %v1964, 7
        %v1966 = vsub.s32 6, %v1965
        %v1967 = vrot.slane %v1915, %v1966
        %1969 = vbcast.lane.b32.xlu0 %v1967, 256
        %v1970 = vpop.permute.xlu0 %1969
        %v1971 = vlaneseq
        %v1972 = vshrl.u32 %v1971, 7
        %v1973 = vsub.s32 7, %v1972
        %v1974 = vrot.slane %v1915, %v1973
        %1976 = vbcast.lane.b32.xlu0 %v1974, 256
        %v1977 = vpop.permute.xlu0 %1976
        %v1978 = vlaneseq
        %v1979 = vshrl.u32 %v1978, 7
        %v1980 = vsub.s32 0, %v1979
        %v1981 = vrot.slane %v1917, %v1980
        %1983 = vbcast.lane.b32.xlu0 %v1981, 256
        %v1984 = vpop.permute.xlu0 %1983
        %v1985 = vlaneseq
        %v1986 = vshrl.u32 %v1985, 7
        %v1987 = vsub.s32 1, %v1986
        %v1988 = vrot.slane %v1917, %v1987
        %1990 = vbcast.lane.b32.xlu0 %v1988, 256
        %v1991 = vpop.permute.xlu0 %1990
        %v1992 = vlaneseq
        %v1993 = vshrl.u32 %v1992, 7
        %v1994 = vsub.s32 2, %v1993
        %v1995 = vrot.slane %v1917, %v1994
        %1997 = vbcast.lane.b32.xlu0 %v1995, 256
        %v1998 = vpop.permute.xlu0 %1997
        %v1999 = vlaneseq
        %v2000 = vshrl.u32 %v1999, 7
        %v2001 = vsub.s32 3, %v2000
        %v2002 = vrot.slane %v1917, %v2001
        %2004 = vbcast.lane.b32.xlu0 %v2002, 256
        %v2005 = vpop.permute.xlu0 %2004
        %v2006 = vlaneseq
        %v2007 = vshrl.u32 %v2006, 7
        %v2008 = vsub.s32 4, %v2007
        %v2009 = vrot.slane %v1917, %v2008
        %2011 = vbcast.lane.b32.xlu0 %v2009, 256
        %v2012 = vpop.permute.xlu0 %2011
        %v2013 = vlaneseq
        %v2014 = vshrl.u32 %v2013, 7
        %v2015 = vsub.s32 5, %v2014
        %v2016 = vrot.slane %v1917, %v2015
        %2018 = vbcast.lane.b32.xlu0 %v2016, 256
        %v2019 = vpop.permute.xlu0 %2018
        %v2020 = vlaneseq
        %v2021 = vshrl.u32 %v2020, 7
        %v2022 = vsub.s32 6, %v2021
        %v2023 = vrot.slane %v1917, %v2022
        %2025 = vbcast.lane.b32.xlu0 %v2023, 256
        %v2026 = vpop.permute.xlu0 %2025
        %v2027 = vlaneseq
        %v2028 = vshrl.u32 %v2027, 7
        %v2029 = vsub.s32 7, %v2028
        %v2030 = vrot.slane %v1917, %v2029
        %2032 = vbcast.lane.b32.xlu0 %v2030, 256
        %v2033 = vpop.permute.xlu0 %2032
        %v2034 = vlaneseq
        %v2035 = vshrl.u32 %v2034, 7
        %v2036 = vsub.s32 0, %v2035
        %v2037 = vrot.slane %v1919, %v2036
        %2039 = vbcast.lane.b32.xlu0 %v2037, 256
        %v2040 = vpop.permute.xlu0 %2039
        %v2041 = vlaneseq
        %v2042 = vshrl.u32 %v2041, 7
        %v2043 = vsub.s32 1, %v2042
        %v2044 = vrot.slane %v1919, %v2043
        %2046 = vbcast.lane.b32.xlu0 %v2044, 256
        %v2047 = vpop.permute.xlu0 %2046
        %v2048 = vlaneseq
        %v2049 = vshrl.u32 %v2048, 7
        %v2050 = vsub.s32 2, %v2049
        %v2051 = vrot.slane %v1919, %v2050
        %2053 = vbcast.lane.b32.xlu0 %v2051, 256
        %v2054 = vpop.permute.xlu0 %2053
        %v2055 = vlaneseq
        %v2056 = vshrl.u32 %v2055, 7
        %v2057 = vsub.s32 3, %v2056
        %v2058 = vrot.slane %v1919, %v2057
        %2060 = vbcast.lane.b32.xlu0 %v2058, 256
        %v2061 = vpop.permute.xlu0 %2060
        %v2062 = vlaneseq
        %v2063 = vshrl.u32 %v2062, 7
        %v2064 = vsub.s32 4, %v2063
        %v2065 = vrot.slane %v1919, %v2064
        %2067 = vbcast.lane.b32.xlu0 %v2065, 256
        %v2068 = vpop.permute.xlu0 %2067
        %v2069 = vlaneseq
        %v2070 = vshrl.u32 %v2069, 7
        %v2071 = vsub.s32 5, %v2070
        %v2072 = vrot.slane %v1919, %v2071
        %2074 = vbcast.lane.b32.xlu0 %v2072, 256
        %v2075 = vpop.permute.xlu0 %2074
        %v2076 = vlaneseq
        %v2077 = vshrl.u32 %v2076, 7
        %v2078 = vsub.s32 6, %v2077
        %v2079 = vrot.slane %v1919, %v2078
        %2081 = vbcast.lane.b32.xlu0 %v2079, 256
        %v2082 = vpop.permute.xlu0 %2081
        %v2083 = vlaneseq
        %v2084 = vshrl.u32 %v2083, 7
        %v2085 = vsub.s32 7, %v2084
        %v2086 = vrot.slane %v1919, %v2085
        %2088 = vbcast.lane.b32.xlu0 %v2086, 256
        %v2089 = vpop.permute.xlu0 %2088
        %v2090 = vlaneseq
        %v2091 = vshrl.u32 %v2090, 7
        %v2092 = vsub.s32 0, %v2091
        %v2093 = vrot.slane %v1921, %v2092
        %2095 = vbcast.lane.b32.xlu0 %v2093, 256
        %v2096 = vpop.permute.xlu0 %2095
        %v2097 = vlaneseq
        %v2098 = vshrl.u32 %v2097, 7
        %v2099 = vsub.s32 1, %v2098
        %v2100 = vrot.slane %v1921, %v2099
        %2102 = vbcast.lane.b32.xlu0 %v2100, 256
        %v2103 = vpop.permute.xlu0 %2102
        %v2104 = vlaneseq
        %v2105 = vshrl.u32 %v2104, 7
        %v2106 = vsub.s32 2, %v2105
        %v2107 = vrot.slane %v1921, %v2106
        %2109 = vbcast.lane.b32.xlu0 %v2107, 256
        %v2110 = vpop.permute.xlu0 %2109
        %v2111 = vlaneseq
        %v2112 = vshrl.u32 %v2111, 7
        %v2113 = vsub.s32 3, %v2112
        %v2114 = vrot.slane %v1921, %v2113
        %2116 = vbcast.lane.b32.xlu0 %v2114, 256
        %v2117 = vpop.permute.xlu0 %2116
        %v2118 = vlaneseq
        %v2119 = vshrl.u32 %v2118, 7
        %v2120 = vsub.s32 4, %v2119
        %v2121 = vrot.slane %v1921, %v2120
        %2123 = vbcast.lane.b32.xlu0 %v2121, 256
        %v2124 = vpop.permute.xlu0 %2123
        %v2125 = vlaneseq
        %v2126 = vshrl.u32 %v2125, 7
        %v2127 = vsub.s32 5, %v2126
        %v2128 = vrot.slane %v1921, %v2127
        %2130 = vbcast.lane.b32.xlu0 %v2128, 256
        %v2131 = vpop.permute.xlu0 %2130
        %v2132 = vlaneseq
        %v2133 = vshrl.u32 %v2132, 7
        %v2134 = vsub.s32 6, %v2133
        %v2135 = vrot.slane %v1921, %v2134
        %2137 = vbcast.lane.b32.xlu0 %v2135, 256
        %v2138 = vpop.permute.xlu0 %2137
        %v2139 = vlaneseq
        %v2140 = vshrl.u32 %v2139, 7
        %v2141 = vsub.s32 7, %v2140
        %v2142 = vrot.slane %v1921, %v2141
        %2144 = vbcast.lane.b32.xlu0 %v2142, 256
        %v2145 = vpop.permute.xlu0 %2144
        %v2146 = vmul.f32 %v1928, %v425
        %v2147 = vmul.f32 %v1935, %v449
        %v2148 = vmul.f32 %v1942, %v432
        %v2149 = vmul.f32 %v1949, %v450
        %v2150 = vmul.f32 %v1956, %v441
        %v2151 = vmul.f32 %v1963, %v451
        %v2152 = vmul.f32 %v1970, %v448
        %v2153 = vmul.f32 %v1977, %v452
        %v2154 = vmul.f32 %v1984, %v493
        %v2155 = vmul.f32 %v1991, %v517
        %v2156 = vmul.f32 %v1998, %v500
        %v2157 = vmul.f32 %v2005, %v518
        %v2158 = vmul.f32 %v2012, %v509
        %v2159 = vmul.f32 %v2019, %v519
        %v2160 = vmul.f32 %v2026, %v516
        %v2161 = vmul.f32 %v2033, %v520
        %v2162 = vmul.f32 %v2040, %v561
        %v2163 = vmul.f32 %v2047, %v585
        %v2164 = vmul.f32 %v2054, %v568
        %v2165 = vmul.f32 %v2061, %v586
        %v2166 = vmul.f32 %v2068, %v577
        %v2167 = vmul.f32 %v2075, %v587
        %v2168 = vmul.f32 %v2082, %v584
        %v2169 = vmul.f32 %v2089, %v588
        %v2170 = vmul.f32 %v2096, %v629
        %v2171 = vmul.f32 %v2103, %v653
        %v2172 = vmul.f32 %v2110, %v636
        %v2173 = vmul.f32 %v2117, %v654
        %v2174 = vmul.f32 %v2124, %v645
        %v2175 = vmul.f32 %v2131, %v655
        %v2176 = vmul.f32 %v2138, %v652
        %v2177 = vmul.f32 %v2145, %v656
        %v2178 = vadd.f32 %v729, %v2146
        %v2179 = vadd.f32 %v753, %v2147
        %v2180 = vadd.f32 %v736, %v2148
        %v2181 = vadd.f32 %v754, %v2149
        %v2182 = vadd.f32 %v745, %v2150
        %v2183 = vadd.f32 %v755, %v2151
        %v2184 = vadd.f32 %v752, %v2152
        %v2185 = vadd.f32 %v756, %v2153
        %v2186 = vadd.f32 %v797, %v2154
        %v2187 = vadd.f32 %v821, %v2155
        %v2188 = vadd.f32 %v804, %v2156
        %v2189 = vadd.f32 %v822, %v2157
        %v2190 = vadd.f32 %v813, %v2158
        %v2191 = vadd.f32 %v823, %v2159
        %v2192 = vadd.f32 %v820, %v2160
        %v2193 = vadd.f32 %v824, %v2161
        %v2194 = vadd.f32 %v865, %v2162
        %v2195 = vadd.f32 %v889, %v2163
        %v2196 = vadd.f32 %v872, %v2164
        %v2197 = vadd.f32 %v890, %v2165
        %v2198 = vadd.f32 %v881, %v2166
        %v2199 = vadd.f32 %v891, %v2167
        %v2200 = vadd.f32 %v888, %v2168
        %v2201 = vadd.f32 %v892, %v2169
        %v2202 = vadd.f32 %v933, %v2170
        %v2203 = vadd.f32 %v957, %v2171
        %v2204 = vadd.f32 %v940, %v2172
        %v2205 = vadd.f32 %v958, %v2173
        %v2206 = vadd.f32 %v949, %v2174
        %v2207 = vadd.f32 %v959, %v2175
        %v2208 = vadd.f32 %v956, %v2176
        %v2209 = vadd.f32 %v960, %v2177
        %v2210 = vcombine.low %v2178, %v2180
        %v2212 = vunpack.c.l.s4 1983009808
        %v2213 = vunpack.c.0.s8 %v2212
        %v2214 = vlaneseq
        %v2215 = vshrl.u32 %v2214, 7
        %v2216 = vsub.s32 %v2213, %v2215
        %v2217 = vrot.slane %v2210, %v2216
        %v2218 = vcombine.low %v2179, %v2181
        %v2220 = vunpack.c.l.s4 1983009808
        %v2221 = vunpack.c.0.s8 %v2220
        %v2222 = vlaneseq
        %v2223 = vshrl.u32 %v2222, 7
        %v2224 = vsub.s32 %v2221, %v2223
        %v2225 = vrot.slane %v2218, %v2224
        %v2226 = vcombine.low %v2182, %v2184
        %v2228 = vunpack.c.l.s4 1983009808
        %v2229 = vunpack.c.0.s8 %v2228
        %v2230 = vlaneseq
        %v2231 = vshrl.u32 %v2230, 7
        %v2232 = vsub.s32 %v2229, %v2231
        %v2233 = vrot.slane %v2226, %v2232
        %v2234 = vcombine.low %v2183, %v2185
        %v2236 = vunpack.c.l.s4 1983009808
        %v2237 = vunpack.c.0.s8 %v2236
        %v2238 = vlaneseq
        %v2239 = vshrl.u32 %v2238, 7
        %v2240 = vsub.s32 %v2237, %v2239
        %v2241 = vrot.slane %v2234, %v2240
        %v2242 = vcombine.low %v2217, %v2225
        %v2243 = vcombine.high %v2217, %v2225
        %v2245 = vunpack.c.l.s4 1934713408
        %v2246 = vunpack.c.0.s8 %v2245
        %v2247 = vlaneseq
        %v2248 = vshrl.u32 %v2247, 7
        %v2249 = vsub.s32 %v2246, %v2248
        %v2250 = vrot.slane %v2242, %v2249
        %v2252 = vunpack.c.l.s4 1934713408
        %v2253 = vunpack.c.0.s8 %v2252
        %v2254 = vlaneseq
        %v2255 = vshrl.u32 %v2254, 7
        %v2256 = vsub.s32 %v2253, %v2255
        %v2257 = vrot.slane %v2243, %v2256
        %v2258 = vcombine.low %v2233, %v2241
        %v2259 = vcombine.high %v2233, %v2241
        %v2261 = vunpack.c.l.s4 1934713408
        %v2262 = vunpack.c.0.s8 %v2261
        %v2263 = vlaneseq
        %v2264 = vshrl.u32 %v2263, 7
        %v2265 = vsub.s32 %v2262, %v2264
        %v2266 = vrot.slane %v2258, %v2265
        %v2268 = vunpack.c.l.s4 1934713408
        %v2269 = vunpack.c.0.s8 %v2268
        %v2270 = vlaneseq
        %v2271 = vshrl.u32 %v2270, 7
        %v2272 = vsub.s32 %v2269, %v2271
        %v2273 = vrot.slane %v2259, %v2272
        %v2274 = vcombine.low %v2250, %v2266
        %v2275 = vcombine.high %v2250, %v2266
        %v2276 = vcombine.low %v2257, %v2273
        %v2277 = vcombine.high %v2257, %v2273
        %v2278 = vcombine.low %v2186, %v2188
        %v2280 = vunpack.c.l.s4 1983009808
        %v2281 = vunpack.c.0.s8 %v2280
        %v2282 = vlaneseq
        %v2283 = vshrl.u32 %v2282, 7
        %v2284 = vsub.s32 %v2281, %v2283
        %v2285 = vrot.slane %v2278, %v2284
        %v2286 = vcombine.low %v2187, %v2189
        %v2288 = vunpack.c.l.s4 1983009808
        %v2289 = vunpack.c.0.s8 %v2288
        %v2290 = vlaneseq
        %v2291 = vshrl.u32 %v2290, 7
        %v2292 = vsub.s32 %v2289, %v2291
        %v2293 = vrot.slane %v2286, %v2292
        %v2294 = vcombine.low %v2190, %v2192
        %v2296 = vunpack.c.l.s4 1983009808
        %v2297 = vunpack.c.0.s8 %v2296
        %v2298 = vlaneseq
        %v2299 = vshrl.u32 %v2298, 7
        %v2300 = vsub.s32 %v2297, %v2299
        %v2301 = vrot.slane %v2294, %v2300
        %v2302 = vcombine.low %v2191, %v2193
        %v2304 = vunpack.c.l.s4 1983009808
        %v2305 = vunpack.c.0.s8 %v2304
        %v2306 = vlaneseq
        %v2307 = vshrl.u32 %v2306, 7
        %v2308 = vsub.s32 %v2305, %v2307
        %v2309 = vrot.slane %v2302, %v2308
        %v2310 = vcombine.low %v2285, %v2293
        %v2311 = vcombine.high %v2285, %v2293
        %v2313 = vunpack.c.l.s4 1934713408
        %v2314 = vunpack.c.0.s8 %v2313
        %v2315 = vlaneseq
        %v2316 = vshrl.u32 %v2315, 7
        %v2317 = vsub.s32 %v2314, %v2316
        %v2318 = vrot.slane %v2310, %v2317
        %v2320 = vunpack.c.l.s4 1934713408
        %v2321 = vunpack.c.0.s8 %v2320
        %v2322 = vlaneseq
        %v2323 = vshrl.u32 %v2322, 7
        %v2324 = vsub.s32 %v2321, %v2323
        %v2325 = vrot.slane %v2311, %v2324
        %v2326 = vcombine.low %v2301, %v2309
        %v2327 = vcombine.high %v2301, %v2309
        %v2329 = vunpack.c.l.s4 1934713408
        %v2330 = vunpack.c.0.s8 %v2329
        %v2331 = vlaneseq
        %v2332 = vshrl.u32 %v2331, 7
        %v2333 = vsub.s32 %v2330, %v2332
        %v2334 = vrot.slane %v2326, %v2333
        %v2336 = vunpack.c.l.s4 1934713408
        %v2337 = vunpack.c.0.s8 %v2336
        %v2338 = vlaneseq
        %v2339 = vshrl.u32 %v2338, 7
        %v2340 = vsub.s32 %v2337, %v2339
        %v2341 = vrot.slane %v2327, %v2340
        %v2342 = vcombine.low %v2318, %v2334
        %v2343 = vcombine.high %v2318, %v2334
        %v2344 = vcombine.low %v2325, %v2341
        %v2345 = vcombine.high %v2325, %v2341
        %v2346 = vcombine.low %v2194, %v2196
        %v2348 = vunpack.c.l.s4 1983009808
        %v2349 = vunpack.c.0.s8 %v2348
        %v2350 = vlaneseq
        %v2351 = vshrl.u32 %v2350, 7
        %v2352 = vsub.s32 %v2349, %v2351
        %v2353 = vrot.slane %v2346, %v2352
        %v2354 = vcombine.low %v2195, %v2197
        %v2356 = vunpack.c.l.s4 1983009808
        %v2357 = vunpack.c.0.s8 %v2356
        %v2358 = vlaneseq
        %v2359 = vshrl.u32 %v2358, 7
        %v2360 = vsub.s32 %v2357, %v2359
        %v2361 = vrot.slane %v2354, %v2360
        %v2362 = vcombine.low %v2198, %v2200
        %v2364 = vunpack.c.l.s4 1983009808
        %v2365 = vunpack.c.0.s8 %v2364
        %v2366 = vlaneseq
        %v2367 = vshrl.u32 %v2366, 7
        %v2368 = vsub.s32 %v2365, %v2367
        %v2369 = vrot.slane %v2362, %v2368
        %v2370 = vcombine.low %v2199, %v2201
        %v2372 = vunpack.c.l.s4 1983009808
        %v2373 = vunpack.c.0.s8 %v2372
        %v2374 = vlaneseq
        %v2375 = vshrl.u32 %v2374, 7
        %v2376 = vsub.s32 %v2373, %v2375
        %v2377 = vrot.slane %v2370, %v2376
        %v2378 = vcombine.low %v2353, %v2361
        %v2379 = vcombine.high %v2353, %v2361
        %v2381 = vunpack.c.l.s4 1934713408
        %v2382 = vunpack.c.0.s8 %v2381
        %v2383 = vlaneseq
        %v2384 = vshrl.u32 %v2383, 7
        %v2385 = vsub.s32 %v2382, %v2384
        %v2386 = vrot.slane %v2378, %v2385
        %v2388 = vunpack.c.l.s4 1934713408
        %v2389 = vunpack.c.0.s8 %v2388
        %v2390 = vlaneseq
        %v2391 = vshrl.u32 %v2390, 7
        %v2392 = vsub.s32 %v2389, %v2391
        %v2393 = vrot.slane %v2379, %v2392
        %v2394 = vcombine.low %v2369, %v2377
        %v2395 = vcombine.high %v2369, %v2377
        %v2397 = vunpack.c.l.s4 1934713408
        %v2398 = vunpack.c.0.s8 %v2397
        %v2399 = vlaneseq
        %v2400 = vshrl.u32 %v2399, 7
        %v2401 = vsub.s32 %v2398, %v2400
        %v2402 = vrot.slane %v2394, %v2401
        %v2404 = vunpack.c.l.s4 1934713408
        %v2405 = vunpack.c.0.s8 %v2404
        %v2406 = vlaneseq
        %v2407 = vshrl.u32 %v2406, 7
        %v2408 = vsub.s32 %v2405, %v2407
        %v2409 = vrot.slane %v2395, %v2408
        %v2410 = vcombine.low %v2386, %v2402
        %v2411 = vcombine.high %v2386, %v2402
        %v2412 = vcombine.low %v2393, %v2409
        %v2413 = vcombine.high %v2393, %v2409
        %v2414 = vcombine.low %v2202, %v2204
        %v2416 = vunpack.c.l.s4 1983009808
        %v2417 = vunpack.c.0.s8 %v2416
        %v2418 = vlaneseq
        %v2419 = vshrl.u32 %v2418, 7
        %v2420 = vsub.s32 %v2417, %v2419
        %v2421 = vrot.slane %v2414, %v2420
        %v2422 = vcombine.low %v2203, %v2205
        %v2424 = vunpack.c.l.s4 1983009808
        %v2425 = vunpack.c.0.s8 %v2424
        %v2426 = vlaneseq
        %v2427 = vshrl.u32 %v2426, 7
        %v2428 = vsub.s32 %v2425, %v2427
        %v2429 = vrot.slane %v2422, %v2428
        %v2430 = vcombine.low %v2206, %v2208
        %v2432 = vunpack.c.l.s4 1983009808
        %v2433 = vunpack.c.0.s8 %v2432
        %v2434 = vlaneseq
        %v2435 = vshrl.u32 %v2434, 7
        %v2436 = vsub.s32 %v2433, %v2435
        %v2437 = vrot.slane %v2430, %v2436
        %v2438 = vcombine.low %v2207, %v2209
        %v2440 = vunpack.c.l.s4 1983009808
        %v2441 = vunpack.c.0.s8 %v2440
        %v2442 = vlaneseq
        %v2443 = vshrl.u32 %v2442, 7
        %v2444 = vsub.s32 %v2441, %v2443
        %v2445 = vrot.slane %v2438, %v2444
        %v2446 = vcombine.low %v2421, %v2429
        %v2447 = vcombine.high %v2421, %v2429
        %v2449 = vunpack.c.l.s4 1934713408
        %v2450 = vunpack.c.0.s8 %v2449
        %v2451 = vlaneseq
        %v2452 = vshrl.u32 %v2451, 7
        %v2453 = vsub.s32 %v2450, %v2452
        %v2454 = vrot.slane %v2446, %v2453
        %v2456 = vunpack.c.l.s4 1934713408
        %v2457 = vunpack.c.0.s8 %v2456
        %v2458 = vlaneseq
        %v2459 = vshrl.u32 %v2458, 7
        %v2460 = vsub.s32 %v2457, %v2459
        %v2461 = vrot.slane %v2447, %v2460
        %v2462 = vcombine.low %v2437, %v2445
        %v2463 = vcombine.high %v2437, %v2445
        %v2465 = vunpack.c.l.s4 1934713408
        %v2466 = vunpack.c.0.s8 %v2465
        %v2467 = vlaneseq
        %v2468 = vshrl.u32 %v2467, 7
        %v2469 = vsub.s32 %v2466, %v2468
        %v2470 = vrot.slane %v2462, %v2469
        %v2472 = vunpack.c.l.s4 1934713408
        %v2473 = vunpack.c.0.s8 %v2472
        %v2474 = vlaneseq
        %v2475 = vshrl.u32 %v2474, 7
        %v2476 = vsub.s32 %v2473, %v2475
        %v2477 = vrot.slane %v2463, %v2476
        %v2478 = vcombine.low %v2454, %v2470
        %v2479 = vcombine.high %v2454, %v2470
        %v2480 = vcombine.low %v2461, %v2477
        %v2481 = vcombine.high %v2461, %v2477
        %2486 = vrot.lane.b32.xlu0 %v2275, 64
        %v2487 = vpop.permute.xlu0 %2486
        %2488 = vrot.lane.b32.xlu0 %v2343, 64
        %v2489 = vpop.permute.xlu0 %2488
        %2490 = vrot.lane.b32.xlu0 %v2411, 64
        %v2491 = vpop.permute.xlu0 %2490
        %2492 = vrot.lane.b32.xlu0 %v2479, 64
        %v2493 = vpop.permute.xlu0 %2492
        %2502 = vrot.lane.b32.xlu0 %v2277, 64
        %v2503 = vpop.permute.xlu0 %2502
        %2504 = vrot.lane.b32.xlu0 %v2345, 64
        %v2505 = vpop.permute.xlu0 %2504
        %2506 = vrot.lane.b32.xlu0 %v2413, 64
        %v2507 = vpop.permute.xlu0 %2506
        %2508 = vrot.lane.b32.xlu0 %v2481, 64
        %v2509 = vpop.permute.xlu0 %2508
        %vm2514 = vcmask 523264
        %v2515 = vsel %vm2514, %v2274, %v2487
        %v2516 = vsel %vm2514, %v2342, %v2489
        %v2517 = vsel %vm2514, %v2410, %v2491
        %v2518 = vsel %vm2514, %v2478, %v2493
        %v2519 = vsel %vm2514, %v2276, %v2503
        %v2520 = vsel %vm2514, %v2344, %v2505
        %v2521 = vsel %vm2514, %v2412, %v2507
        %v2522 = vsel %vm2514, %v2480, %v2509
        %2523 = vst [vmem:[%s336] sm:$0xff] %v2515
        %2524 = vst [vmem:[%s336 + $0x8] sm:$0xff] %v2519
        %2525 = vst [vmem:[%s336 + $0x10] sm:$0xff] %v2516
        %2526 = vst [vmem:[%s336 + $0x18] sm:$0xff] %v2520
        %2527 = vst [vmem:[%s336 + $0x20] sm:$0xff] %v2517
        %2528 = vst [vmem:[%s336 + $0x28] sm:$0xff] %v2521
        %2529 = vst [vmem:[%s336 + $0x30] sm:$0xff] %v2518
        %2530 = vst [vmem:[%s336 + $0x38] sm:$0xff] %v2522
        %s2531 = sand.u32 %s192, 1
        %s2532 = scalar_lea.sflag [#allocation4], %s2531
        %s2533 = sand.u32 %s192, 1
        %s2534 = smul.addr %s2533, 64
        %s2535 = scalar_lea.vmem [#allocation7], %s2534
        // Predicated region
        $region57: #{tpu_custom_call.1} parent=47 // pred_check
          %p2536 = pneg %p202
        $region58: #{tpu_custom_call.1} parent=47 // pred_check_branch
          %2538 = sbr.rel (%p2536) target = $region60
        $region59: #{tpu_custom_call.1} parent=47 // pred_region
          %s2540 = ssub.s32 1024, 1024
          %2541 = vsyncadd %s2532, %s2540
          %s2542 = smul.addr %s27, 8
          %s2543 = smul.addr %s2542, 128
          %s2544 = scalar_lea.hbm %s7, %s2543
          %s2545 = sshll.u32 %s2535, 4
          %s2546 = int_to_ptr.vmem [resolvable:$true] %s2545
          %2551 = dma.vmem_to_hbm [thread:$0]  %s2546, 1024, %s2544, %s2532, 256, 256, 16
        $region60: #{tpu_custom_call.1} parent=47 // pred_fallthru
          _
      $region48: #{tpu_custom_call.1} parent=5 // pred_fallthru
        _
      %p2552 = scmp.le.s32.totalorder 2, %s22
      // Predicated region
      $region61: #{tpu_custom_call.1} parent=5 // pred_check
        %p2553 = pneg %p2552
      $region62: #{tpu_custom_call.1} parent=5 // pred_check_branch
        %2555 = sbr.rel (%p2553) target = $region64
      $region63: #{tpu_custom_call.1} parent=5 // pred_region
        %s2556 = ssub.s32 %s22, 2
        // Predicated region
        $region65: #{tpu_custom_call.1} parent=63 // pred_check
          %p2557 = pneg %p208
        $region66: #{tpu_custom_call.1} parent=63 // pred_check_branch
          %2559 = sbr.rel (%p2557) target = $region68
        $region67: #{tpu_custom_call.1} parent=63 // pred_region
          %s2560 = sand.u32 %s193, 1
          %s2561 = scalar_lea.sflag [#allocation4], %s2560
          %s2562 = sand.u32 %s193, 1
          %s2563 = smul.addr %s2562, 64
          %s2564 = scalar_lea.vmem [#allocation7], %s2563
          %2565 = dma.done %s2561, 1024
        $region68: #{tpu_custom_call.1} parent=63 // pred_fallthru
          _
      $region64: #{tpu_custom_call.1} parent=5 // pred_fallthru
        _
    $region6: #{tpu_custom_call.1} parent=1 // loop_footer
      %s26 = sadd.s32 1, %s22
    $region7: #{tpu_custom_call.1} parent=1 // loop_footer_branch
      %21 = sbr.rel target = $region3
    $region8: #{tpu_custom_call.1} parent=1 // loop_exit
      _
    %2566 = vsyncpa [#allocation3], 1
    %s2567 = scalar_lea.sflag [#allocation3], 1
    %2568 = vsyncpa %s2567, 1
    %2569 = vsyncpa [#allocation6], 1
    %s2570 = scalar_lea.sflag [#allocation6], 1
    %2571 = vsyncpa %s2570, 1
    %2572 = vsyncpa [#allocation4], 1
    %s2573 = scalar_lea.sflag [#allocation4], 1
    %2574 = vsyncpa %s2573, 1

</llo_original>
